<compile_context>
chip_gen: v5e
topology: v5e:2x2
jax: 0.10.0
libtpu: 0.0.40
codegen_flags: <defaults>
</compile_context>

<pallas_src>
import functools

import jax
import jax.numpy as jnp
from jax import lax
from jax.experimental import pallas as pl
from jax.experimental.pallas import tpu as pltpu

LANE = 128
SUBLANE = 8
VMEM_LIMIT = 64 * 1024 * 1024  # explicit scoped-VMEM budget (safe on v7x 64 MiB)


def _round_up(x, m):
    return (x + m - 1) // m * m


# ----------------------------------------------------------------------------
# Kernel 1: fused conv1+bn1+relu -> conv2(3x3 grouped)+bn2+relu -> conv3+bn3
#           with fused per-sample global sum pooling. Grid = (N,).
# ----------------------------------------------------------------------------
def _fused_conv_kernel(x_ref, w1_ref, b1_ref, w2_ref, b2_ref, w3_ref, b3_ref,
                       y_ref, pool_ref, h1pad_ref, *, H, W, pad_rows):
    HW = H * W
    Cmid = w1_ref.shape[1]

    # ---- conv1 (1x1, BN scale folded into w1) + bias + ReLU -----------------
    x = x_ref[0]                                                # (HW, Cin_p) bf16
    h1 = jnp.dot(x, w1_ref[...], preferred_element_type=jnp.float32)
    h1 = jnp.maximum(h1 + b1_ref[...], 0.0)                     # (HW, Cmid_p) f32

    # ---- conv2 (3x3 grouped, pad=1, stride=1) as 9 shifted matmuls ----------
    # Stage h1 in a zero-padded VMEM scratch so the row shift d = dh*W + dw
    # becomes a static-offset window read; out-of-image rows along H land in
    # the zero pad rows, out-of-image columns along W are masked out.
    zeros_pad = jnp.zeros((pad_rows, Cmid), jnp.float32)
    h1pad_ref[pl.ds(0, pad_rows), :] = zeros_pad
    h1pad_ref[pl.ds(pad_rows + HW, pad_rows), :] = zeros_pad
    h1pad_ref[pl.ds(pad_rows, HW), :] = h1

    row = lax.broadcasted_iota(jnp.int32, (HW, 1), 0)
    col = row % W
    mask_l = col >= 1            # reading the left neighbour (dw = -1) is valid
    mask_r = col <= (W - 2)      # reading the right neighbour (dw = +1) is valid

    acc = jnp.zeros((HW, Cmid), jnp.float32)
    for dh in (-1, 0, 1):
        for dw in (-1, 0, 1):
            t = (dh + 1) * 3 + (dw + 1)                      # tap index kh*3+kw
            win = h1pad_ref[pl.ds(pad_rows + dh * W + dw, HW), :]
            if dw == -1:
                win = jnp.where(mask_l, win, 0.0)
            elif dw == 1:
                win = jnp.where(mask_r, win, 0.0)
            acc = acc + jnp.dot(win.astype(jnp.bfloat16), w2_ref[t],
                                preferred_element_type=jnp.float32)
    h2 = jnp.maximum(acc + b2_ref[...], 0.0).astype(jnp.bfloat16)

    # ---- conv3 (1x1, BN scale folded) + bias, fused global sum pooling ------
    y = jnp.dot(h2, w3_ref[...], preferred_element_type=jnp.float32)
    y = y + b3_ref[...]
    y_ref[0] = y.astype(y_ref.dtype)
    pool_ref[0] = jnp.sum(y, axis=0, keepdims=True)             # (1, Cexp_p)


def fused_conv_bn(x2, w1, b1, w2, b2, w3, b3, *, H, W, out_dtype=jnp.bfloat16):
    """x2: (N, H*W, Cin_p) bf16; returns y (N, H*W, Cexp_p) bf16, pooled sum f32."""
    # TODO(synk): for very large H*W, tile the spatial dim with 1-row halos per
    # block instead of holding the full per-sample image in VMEM.
    N, HW, Cin_p = x2.shape
    Cmid_p = w1.shape[1]
    Cexp_p = w3.shape[1]
    pad_rows = _round_up(W + 1, SUBLANE)
    kernel = functools.partial(_fused_conv_kernel, H=H, W=W, pad_rows=pad_rows)
    return pl.pallas_call(
        kernel,
        out_shape=(jax.ShapeDtypeStruct((N, HW, Cexp_p), out_dtype),
                   jax.ShapeDtypeStruct((N, 1, Cexp_p), jnp.float32)),
        grid=(N,),
        in_specs=[
            pl.BlockSpec((1, HW, Cin_p), lambda n: (n, 0, 0)),
            pl.BlockSpec((Cin_p, Cmid_p), lambda n: (0, 0)),      # weights resident
            pl.BlockSpec((1, Cmid_p), lambda n: (0, 0)),
            pl.BlockSpec((9, Cmid_p, Cmid_p), lambda n: (0, 0, 0)),
            pl.BlockSpec((1, Cmid_p), lambda n: (0, 0)),
            pl.BlockSpec((Cmid_p, Cexp_p), lambda n: (0, 0)),
            pl.BlockSpec((1, Cexp_p), lambda n: (0, 0)),
        ],
        out_specs=(pl.BlockSpec((1, HW, Cexp_p), lambda n: (n, 0, 0)),
                   pl.BlockSpec((1, 1, Cexp_p), lambda n: (n, 0, 0))),
        scratch_shapes=[pltpu.VMEM((HW + 2 * pad_rows, Cmid_p), jnp.float32)],
        compiler_params=pltpu.CompilerParams(
            dimension_semantics=("parallel",),
            vmem_limit_bytes=VMEM_LIMIT),
    )(x2, w1, b1, w2, b2, w3, b3)


# ----------------------------------------------------------------------------
# Kernel 2: SE scale + residual add + ReLU (bf16 in / bf16 out, row-tiled).
# ----------------------------------------------------------------------------
def _tail_kernel(y_ref, s_ref, r_ref, o_ref):
    y = y_ref[0].astype(jnp.float32)                            # (tm, C)
    out = y * s_ref[0] + r_ref[0].astype(jnp.float32)
    o_ref[0] = jnp.maximum(out, 0.0).astype(o_ref.dtype)


def se_scale_residual_relu(y, s, residual, *, row_tile=1024):
    N, HW, C = y.shape
    tm = HW if HW <= row_tile else row_tile
    return pl.pallas_call(
        _tail_kernel,
        out_shape=jax.ShapeDtypeStruct((N, HW, C), jnp.bfloat16),
        grid=(N, pl.cdiv(HW, tm)),
        in_specs=[
            pl.BlockSpec((1, tm, C), lambda n, j: (n, j, 0)),
            pl.BlockSpec((1, 1, C), lambda n, j: (n, 0, 0)),
            pl.BlockSpec((1, tm, C), lambda n, j: (n, j, 0)),
        ],
        out_specs=pl.BlockSpec((1, tm, C), lambda n, j: (n, j, 0)),
        compiler_params=pltpu.CompilerParams(
            dimension_semantics=("parallel", "parallel"),
            vmem_limit_bytes=VMEM_LIMIT),
    )(y, s, residual)


# ----------------------------------------------------------------------------
# Glue: BN folding (scale into weight columns), channel padding, grouped weight
# ----------------------------------------------------------------------------
def fold_bn(gamma, beta, mean, var, eps=1e-5):
    scale = gamma / jnp.sqrt(var + eps)
    bias = beta - mean * scale
    return scale, bias


def pad_bias(bias, c_pad):
    return jnp.zeros((1, c_pad), jnp.float32).at[0, :bias.shape[0]].set(bias)


def build_w_1x1(w_torch, scale, cin_pad, cout_pad):
    """(Cout, Cin, 1, 1) -> (cin_pad, cout_pad), BN scale folded into columns."""
    w = w_torch[:, :, 0, 0].T * scale[None, :]
    cin, cout = w.shape
    return jnp.zeros((cin_pad, cout_pad), jnp.float32).at[:cin, :cout].set(w)


def build_grouped_weight(w_torch, scale, cardinality, c_pad):
    """(Cout, Cin/g, 3, 3) grouped weight -> (9, c_pad, c_pad): one dense
    block-diagonal (Cin_p, Cout_p) matrix per 3x3 tap, BN scale folded into
    columns. Dense block-diag is acceptable: Cg = Cmid/cardinality is small."""
    Cout, Cg, KH, KW = w_torch.shape
    cout_g = Cout // cardinality
    wt = w_torch.reshape(cardinality, cout_g, Cg, KH, KW)
    wt = jnp.transpose(wt, (3, 4, 0, 2, 1)).reshape(KH * KW, cardinality, Cg, cout_g)
    w = jnp.zeros((KH * KW, c_pad, c_pad), jnp.float32)
    for g in range(cardinality):
        w = w.at[:, g * Cg:(g + 1) * Cg, g * cout_g:(g + 1) * cout_g].set(wt[:, g])
    scale_p = jnp.zeros((c_pad,), jnp.float32).at[:Cout].set(scale)
    return w * scale_p[None, None, :]


def bottleneckx_forward(x_nchw, p, *, planes, cardinality, stride=1):
    """Forward pass of BottleneckX (downsample=None path: stride=1, inplanes==planes*4)."""
    # TODO(synk): downsample / stride>1 branch not implemented (None in this config).
    N, Cin, H, W = x_nchw.shape
    Cmid, Cexp = planes * 2, planes * 4
    assert stride == 1 and Cin == Cexp, "only the identity-residual path is implemented"

    Cin_p = _round_up(Cin, LANE)
    Cmid_p = _round_up(Cmid, LANE)
    Cexp_p = _round_up(Cexp, LANE)
    HW = H * W

    # NCHW -> channels-last, lane-pad, cast bf16 (single fused XLA pass).
    # TODO(synk): fold this layout pass into the fused kernel's input DMA.
    x_nhwc = jnp.transpose(x_nchw, (0, 2, 3, 1))
    x_p = jnp.pad(x_nhwc, ((0, 0), (0, 0), (0, 0), (0, Cin_p - Cin)))
    x2 = x_p.reshape(N, HW, Cin_p).astype(jnp.bfloat16)

    s1, b1 = fold_bn(*p["bn1"])
    s2, b2 = fold_bn(*p["bn2"])
    s3, b3 = fold_bn(*p["bn3"])

    w1 = build_w_1x1(p["w1"], s1, Cin_p, Cmid_p).astype(jnp.bfloat16)
    w2 = build_grouped_weight(p["w2"], s2, cardinality, Cmid_p).astype(jnp.bfloat16)
    w3 = build_w_1x1(p["w3"], s3, Cmid_p, Cexp_p).astype(jnp.bfloat16)
    b1p = pad_bias(b1, Cmid_p)
    b2p = pad_bias(b2, Cmid_p)
    b3p = pad_bias(b3, Cexp_p)

    # Fused conv1 -> conv2 -> conv3 (+ global sum pool); intermediates stay in VMEM.
    y, pooled = fused_conv_bn(x2, w1, b1p, w2, b2p, w3, b3p, H=H, W=W)

    # SE squeeze/excite FCs (tiny N x C matmuls) in plain JAX; 1/HW folded here.
    pooled_mean = pooled[:, 0, :Cexp] / float(HW)                # (N, Cexp)
    w_se1 = p["w_se1"][:, :, 0, 0].T                             # (Cexp, Cexp//16)
    w_se2 = p["w_se2"][:, :, 0, 0].T                             # (Cexp//16, Cexp)
    h = jnp.maximum(pooled_mean @ w_se1 + p["b_se1"][None, :], 0.0)
    s = jax.nn.sigmoid(h @ w_se2 + p["b_se2"][None, :])          # (N, Cexp)
    s_pad = jnp.zeros((N, 1, Cexp_p), jnp.float32).at[:, 0, :Cexp].set(s)

    # SE scale + residual add + ReLU tail (bf16 residual / bf16 output).
    out = se_scale_residual_relu(y, s_pad, x2)                   # (N, HW, Cexp_p) bf16

    # TODO(synk): fold the final slice + NHWC->NCHW transpose into the consumer.
    out = out[:, :, :Cexp].astype(jnp.float32).reshape(N, H, W, Cexp)
    return jnp.transpose(out, (0, 3, 1, 2))                      # back to NCHW


# ----------------------------------------------------------------------------
# Pure-JAX reference (mirrors the PyTorch module, NCHW, f32) for a sanity check
# ----------------------------------------------------------------------------
def reference_forward(x, p, *, cardinality, stride=1):
    dn = ("NCHW", "OIHW", "NCHW")

    def bn(y, gamma, beta, mean, var, eps=1e-5):
        sc = gamma / jnp.sqrt(var + eps)
        return (y - mean[None, :, None, None]) * sc[None, :, None, None] \
            + beta[None, :, None, None]

    out = lax.conv_general_dilated(x, p["w1"], (1, 1), "VALID",
                                   dimension_numbers=dn)
    out = jnp.maximum(bn(out, *p["bn1"]), 0.0)
    out = lax.conv_general_dilated(out, p["w2"], (stride, stride),
                                   ((1, 1), (1, 1)), dimension_numbers=dn,
                                   feature_group_count=cardinality)
    out = jnp.maximum(bn(out, *p["bn2"]), 0.0)
    out = lax.conv_general_dilated(out, p["w3"], (1, 1), "VALID",
                                   dimension_numbers=dn)
    out = bn(out, *p["bn3"])
    pooled = jnp.mean(out, axis=(2, 3), keepdims=True)
    h = lax.conv_general_dilated(pooled, p["w_se1"], (1, 1), "VALID",
                                 dimension_numbers=dn) \
        + p["b_se1"][None, :, None, None]
    h = jnp.maximum(h, 0.0)
    s = lax.conv_general_dilated(h, p["w_se2"], (1, 1), "VALID",
                                 dimension_numbers=dn) \
        + p["b_se2"][None, :, None, None]
    s = jax.nn.sigmoid(s)
    out = out * s + x
    return jnp.maximum(out, 0.0)


# ----------------------------------------------------------------------------
# Main
# ----------------------------------------------------------------------------
if __name__ == "__main__":
    # Small shapes consistent with the module: inplanes == planes*4 (identity
    # residual valid) and planes*4 >= 16 for the SE squeeze.
    N, H, W = 2, 8, 8
    planes, cardinality, stride = 16, 8, 1
    inplanes = planes * 4            # 64
    Cmid, Cexp = planes * 2, planes * 4

    key = jax.random.PRNGKey(0)
    ks = jax.random.split(key, 12)

    def make_bn(k, c):
        k1, k2, k3, k4 = jax.random.split(k, 4)
        gamma = jax.random.uniform(k1, (c,), minval=0.5, maxval=1.5)
        beta = 0.1 * jax.random.normal(k2, (c,))
        mean = 0.1 * jax.random.normal(k3, (c,))
        var = jax.random.uniform(k4, (c,), minval=0.5, maxval=1.5)
        return (gamma.astype(jnp.float32), beta.astype(jnp.float32),
                mean.astype(jnp.float32), var.astype(jnp.float32))

    params = {
        "w1": 0.1 * jax.random.normal(ks[0], (Cmid, inplanes, 1, 1), jnp.float32),
        "bn1": make_bn(ks[1], Cmid),
        "w2": 0.1 * jax.random.normal(ks[2], (Cmid, Cmid // cardinality, 3, 3), jnp.float32),
        "bn2": make_bn(ks[3], Cmid),
        "w3": 0.1 * jax.random.normal(ks[4], (Cexp, Cmid, 1, 1), jnp.float32),
        "bn3": make_bn(ks[5], Cexp),
        "w_se1": 0.1 * jax.random.normal(ks[6], (Cexp // 16, Cexp, 1, 1), jnp.float32),
        "b_se1": 0.1 * jax.random.normal(ks[7], (Cexp // 16,), jnp.float32),
        "w_se2": 0.1 * jax.random.normal(ks[8], (Cexp, Cexp // 16, 1, 1), jnp.float32),
        "b_se2": 0.1 * jax.random.normal(ks[9], (Cexp,), jnp.float32),
    }

    x = jax.random.normal(ks[10], (N, inplanes, H, W), jnp.float32)

    fwd = jax.jit(functools.partial(bottleneckx_forward, planes=planes,
                                    cardinality=cardinality, stride=stride))
    out = jax.block_until_ready(fwd(x, params))

    ref = jax.block_until_ready(
        reference_forward(x, params, cardinality=cardinality, stride=stride))

    # bf16 matmul operands / intermediates / residual with f32 accumulation ->
    # loosened tolerance vs the all-f32 reference.
    max_err = float(jnp.max(jnp.abs(out - ref)))
    if max_err > 1e-1:
        raise AssertionError(f"Pallas output mismatch vs reference: {max_err}")

    print("KERNEL_OK")
</pallas_src>

<mosaic_0001>
module attributes {stable_mosaic.version = 11 : i64} {
  func.func @_fused_conv_kernel(%arg0: i32, %arg1: memref<1x64x128xbf16, #tpu.memory_space<vmem>>, %arg2: memref<128x128xbf16, #tpu.memory_space<vmem>>, %arg3: memref<1x128xf32, #tpu.memory_space<vmem>>, %arg4: memref<9x128x128xbf16, #tpu.memory_space<vmem>>, %arg5: memref<1x128xf32, #tpu.memory_space<vmem>>, %arg6: memref<128x128xbf16, #tpu.memory_space<vmem>>, %arg7: memref<1x128xf32, #tpu.memory_space<vmem>>, %arg8: memref<1x64x128xbf16, #tpu.memory_space<vmem>>, %arg9: memref<1x1x128xf32, #tpu.memory_space<vmem>>, %arg10: memref<96x128xf32, #tpu.memory_space<vmem>>) attributes {dimension_semantics = [#tpu.dimension_semantics<parallel>], iteration_bounds = array<i64: 2>, scalar_prefetch = 0 : i64, scratch_operands = 1 : i64, tpu.core_type = #tpu.core_type<tc>, window_params = [{transform_indices = @transform_0, window_bounds = array<i64: 1, 64, 128>}, {pipeline_mode = #tpu.pipeline_mode<synchronous>, transform_indices = @transform_1, window_bounds = array<i64: 128, 128>}, {pipeline_mode = #tpu.pipeline_mode<synchronous>, transform_indices = @transform_2, window_bounds = array<i64: 1, 128>}, {pipeline_mode = #tpu.pipeline_mode<synchronous>, transform_indices = @transform_3, window_bounds = array<i64: 9, 128, 128>}, {pipeline_mode = #tpu.pipeline_mode<synchronous>, transform_indices = @transform_4, window_bounds = array<i64: 1, 128>}, {pipeline_mode = #tpu.pipeline_mode<synchronous>, transform_indices = @transform_5, window_bounds = array<i64: 128, 128>}, {pipeline_mode = #tpu.pipeline_mode<synchronous>, transform_indices = @transform_6, window_bounds = array<i64: 1, 128>}, {transform_indices = @transform_7, window_bounds = array<i64: 1, 64, 128>}, {transform_indices = @transform_8, window_bounds = array<i64: 1, 1, 128>}]} {
    %c0 = arith.constant 0 : index
    %c0_0 = arith.constant 0 : index
    %c0_1 = arith.constant 0 : index
    %0 = vector.load %arg1[%c0, %c0_0, %c0_1] : memref<1x64x128xbf16, #tpu.memory_space<vmem>>, vector<1x64x128xbf16>
    %1 = vector.shape_cast %0 : vector<1x64x128xbf16> to vector<64x128xbf16>
    %c0_2 = arith.constant 0 : index
    %c0_3 = arith.constant 0 : index
    %2 = vector.load %arg2[%c0_2, %c0_3] : memref<128x128xbf16, #tpu.memory_space<vmem>>, vector<128x128xbf16>
    %cst = arith.constant dense<0.000000e+00> : vector<64x128xf32>
    %3 = tpu.matmul %1, %2, %cst {dimension_numbers = #tpu.dot_dimension_numbers<[1], [0], [0], [1], [0, 0, 1, 1], [], []>} : vector<64x128xbf16>, vector<128x128xbf16>, vector<64x128xf32> -> vector<64x128xf32>
    %c0_4 = arith.constant 0 : index
    %c0_5 = arith.constant 0 : index
    %4 = vector.load %arg3[%c0_4, %c0_5] : memref<1x128xf32, #tpu.memory_space<vmem>>, vector<1x128xf32>
    %5 = vector.broadcast %4 : vector<1x128xf32> to vector<64x128xf32>
    %6 = arith.addf %3, %5 : vector<64x128xf32>
    %cst_6 = arith.constant 0.000000e+00 : f32
    %7 = vector.broadcast %cst_6 : f32 to vector<64x128xf32>
    %8 = arith.maximumf %6, %7 : vector<64x128xf32>
    %cst_7 = arith.constant 0.000000e+00 : f32
    %9 = vector.broadcast %cst_7 : f32 to vector<16x128xf32>
    %c0_8 = arith.constant 0 : index
    %c0_9 = arith.constant 0 : index
    %10 = vector.load %arg10[%c0_8, %c0_9] : memref<96x128xf32, #tpu.memory_space<vmem>>, vector<16x128xf32>
    tpu.vector_store %arg10[%c0_8, %c0_9], %9 {strides = array<i32>} : memref<96x128xf32, #tpu.memory_space<vmem>>, vector<16x128xf32>,
    %c80 = arith.constant 80 : index
    %c0_10 = arith.constant 0 : index
    %11 = vector.load %arg10[%c80, %c0_10] : memref<96x128xf32, #tpu.memory_space<vmem>>, vector<16x128xf32>
    tpu.vector_store %arg10[%c80, %c0_10], %9 {strides = array<i32>} : memref<96x128xf32, #tpu.memory_space<vmem>>, vector<16x128xf32>,
    %c16 = arith.constant 16 : index
    %c0_11 = arith.constant 0 : index
    %12 = vector.load %arg10[%c16, %c0_11] : memref<96x128xf32, #tpu.memory_space<vmem>>, vector<64x128xf32>
    tpu.vector_store %arg10[%c16, %c0_11], %8 {strides = array<i32>} : memref<96x128xf32, #tpu.memory_space<vmem>>, vector<64x128xf32>,
    %13 = tpu.iota {dimensions = array<i32: 0>} : vector<64x1xi32>
    %c8_i32 = arith.constant 8 : i32
    %c0_i32 = arith.constant 0 : i32
    %14 = arith.cmpi eq, %c8_i32, %c0_i32 : i32
    %c1_i32 = arith.constant 1 : i32
    %15 = arith.select %14, %c1_i32, %c8_i32 : i32
    %16 = vector.broadcast %15 : i32 to vector<64x1xi32>
    %17 = arith.remsi %13, %16 : vector<64x1xi32>
    %c0_i32_12 = arith.constant 0 : i32
    %18 = vector.broadcast %c0_i32_12 : i32 to vector<64x1xi32>
    %19 = arith.cmpi ne, %17, %18 : vector<64x1xi32>
    %c0_i32_13 = arith.constant 0 : i32
    %20 = vector.broadcast %c0_i32_13 : i32 to vector<64x1xi32>
    %21 = arith.cmpi slt, %17, %20 : vector<64x1xi32>
    %c0_i32_14 = arith.constant 0 : i32
    %22 = arith.cmpi slt, %15, %c0_i32_14 : i32
    %23 = vector.broadcast %22 : i1 to vector<64x1xi1>
    %24 = vector.broadcast %23 : vector<64x1xi1> to vector<64x1xi1>
    %25 = arith.xori %21, %24 : vector<64x1xi1>
    %26 = arith.andi %25, %19 : vector<64x1xi1>
    %27 = vector.broadcast %15 : i32 to vector<64x1xi32>
    %28 = arith.addi %17, %27 : vector<64x1xi32>
    %29 = arith.select %26, %28, %17 : vector<64x1xi1>, vector<64x1xi32>
    %c1_i32_15 = arith.constant 1 : i32
    %30 = vector.broadcast %c1_i32_15 : i32 to vector<64x1xi32>
    %31 = arith.cmpi sge, %29, %30 : vector<64x1xi32>
    %c6_i32 = arith.constant 6 : i32
    %32 = vector.broadcast %c6_i32 : i32 to vector<64x1xi32>
    %33 = arith.cmpi sle, %29, %32 : vector<64x1xi32>
    %cst_16 = arith.constant 0.000000e+00 : f32
    %34 = vector.broadcast %cst_16 : f32 to vector<64x128xf32>
    %c7 = arith.constant 7 : index
    %c0_17 = arith.constant 0 : index
    %35 = vector.load %arg10[%c7, %c0_17] : memref<96x128xf32, #tpu.memory_space<vmem>>, vector<64x128xf32>
    %cst_18 = arith.constant 0.000000e+00 : f32
    %36 = vector.shape_cast %31 : vector<64x1xi1> to vector<64x1xi1>
    %37 = vector.broadcast %36 : vector<64x1xi1> to vector<64x128xi1>
    %38 = vector.broadcast %cst_18 : f32 to vector<64x128xf32>
    %39 = arith.select %37, %35, %38 : vector<64x128xi1>, vector<64x128xf32>
    %40 = arith.truncf %39 : vector<64x128xf32> to vector<64x128xbf16>
    %c0_19 = arith.constant 0 : index
    %c0_20 = arith.constant 0 : index
    %c0_21 = arith.constant 0 : index
    %41 = vector.load %arg4[%c0_19, %c0_20, %c0_21] : memref<9x128x128xbf16, #tpu.memory_space<vmem>>, vector<1x128x128xbf16>
    %42 = vector.shape_cast %41 : vector<1x128x128xbf16> to vector<128x128xbf16>
    %cst_22 = arith.constant dense<0.000000e+00> : vector<64x128xf32>
    %43 = tpu.matmul %40, %42, %cst_22 {dimension_numbers = #tpu.dot_dimension_numbers<[1], [0], [0], [1], [0, 0, 1, 1], [], []>} : vector<64x128xbf16>, vector<128x128xbf16>, vector<64x128xf32> -> vector<64x128xf32>
    %44 = arith.addf %34, %43 : vector<64x128xf32>
    %c8 = arith.constant 8 : index
    %c0_23 = arith.constant 0 : index
    %45 = vector.load %arg10[%c8, %c0_23] : memref<96x128xf32, #tpu.memory_space<vmem>>, vector<64x128xf32>
    %46 = arith.truncf %45 : vector<64x128xf32> to vector<64x128xbf16>
    %c1 = arith.constant 1 : index
    %c0_24 = arith.constant 0 : index
    %c0_25 = arith.constant 0 : index
    %47 = vector.load %arg4[%c1, %c0_24, %c0_25] : memref<9x128x128xbf16, #tpu.memory_space<vmem>>, vector<1x128x128xbf16>
    %48 = vector.shape_cast %47 : vector<1x128x128xbf16> to vector<128x128xbf16>
    %cst_26 = arith.constant dense<0.000000e+00> : vector<64x128xf32>
    %49 = tpu.matmul %46, %48, %cst_26 {dimension_numbers = #tpu.dot_dimension_numbers<[1], [0], [0], [1], [0, 0, 1, 1], [], []>} : vector<64x128xbf16>, vector<128x128xbf16>, vector<64x128xf32> -> vector<64x128xf32>
    %50 = arith.addf %44, %49 : vector<64x128xf32>
    %c9 = arith.constant 9 : index
    %c0_27 = arith.constant 0 : index
    %51 = vector.load %arg10[%c9, %c0_27] : memref<96x128xf32, #tpu.memory_space<vmem>>, vector<64x128xf32>
    %cst_28 = arith.constant 0.000000e+00 : f32
    %52 = vector.shape_cast %33 : vector<64x1xi1> to vector<64x1xi1>
    %53 = vector.broadcast %52 : vector<64x1xi1> to vector<64x128xi1>
    %54 = vector.broadcast %cst_28 : f32 to vector<64x128xf32>
    %55 = arith.select %53, %51, %54 : vector<64x128xi1>, vector<64x128xf32>
    %56 = arith.truncf %55 : vector<64x128xf32> to vector<64x128xbf16>
    %c2 = arith.constant 2 : index
    %c0_29 = arith.constant 0 : index
    %c0_30 = arith.constant 0 : index
    %57 = vector.load %arg4[%c2, %c0_29, %c0_30] : memref<9x128x128xbf16, #tpu.memory_space<vmem>>, vector<1x128x128xbf16>
    %58 = vector.shape_cast %57 : vector<1x128x128xbf16> to vector<128x128xbf16>
    %cst_31 = arith.constant dense<0.000000e+00> : vector<64x128xf32>
    %59 = tpu.matmul %56, %58, %cst_31 {dimension_numbers = #tpu.dot_dimension_numbers<[1], [0], [0], [1], [0, 0, 1, 1], [], []>} : vector<64x128xbf16>, vector<128x128xbf16>, vector<64x128xf32> -> vector<64x128xf32>
    %60 = arith.addf %50, %59 : vector<64x128xf32>
    %c15 = arith.constant 15 : index
    %c0_32 = arith.constant 0 : index
    %61 = vector.load %arg10[%c15, %c0_32] : memref<96x128xf32, #tpu.memory_space<vmem>>, vector<64x128xf32>
    %cst_33 = arith.constant 0.000000e+00 : f32
    %62 = vector.shape_cast %31 : vector<64x1xi1> to vector<64x1xi1>
    %63 = vector.broadcast %62 : vector<64x1xi1> to vector<64x128xi1>
    %64 = vector.broadcast %cst_33 : f32 to vector<64x128xf32>
    %65 = arith.select %63, %61, %64 : vector<64x128xi1>, vector<64x128xf32>
    %66 = arith.truncf %65 : vector<64x128xf32> to vector<64x128xbf16>
    %c3 = arith.constant 3 : index
    %c0_34 = arith.constant 0 : index
    %c0_35 = arith.constant 0 : index
    %67 = vector.load %arg4[%c3, %c0_34, %c0_35] : memref<9x128x128xbf16, #tpu.memory_space<vmem>>, vector<1x128x128xbf16>
    %68 = vector.shape_cast %67 : vector<1x128x128xbf16> to vector<128x128xbf16>
    %cst_36 = arith.constant dense<0.000000e+00> : vector<64x128xf32>
    %69 = tpu.matmul %66, %68, %cst_36 {dimension_numbers = #tpu.dot_dimension_numbers<[1], [0], [0], [1], [0, 0, 1, 1], [], []>} : vector<64x128xbf16>, vector<128x128xbf16>, vector<64x128xf32> -> vector<64x128xf32>
    %70 = arith.addf %60, %69 : vector<64x128xf32>
    %c16_37 = arith.constant 16 : index
    %c0_38 = arith.constant 0 : index
    %71 = vector.load %arg10[%c16_37, %c0_38] : memref<96x128xf32, #tpu.memory_space<vmem>>, vector<64x128xf32>
    %72 = arith.truncf %71 : vector<64x128xf32> to vector<64x128xbf16>
    %c4 = arith.constant 4 : index
    %c0_39 = arith.constant 0 : index
    %c0_40 = arith.constant 0 : index
    %73 = vector.load %arg4[%c4, %c0_39, %c0_40] : memref<9x128x128xbf16, #tpu.memory_space<vmem>>, vector<1x128x128xbf16>
    %74 = vector.shape_cast %73 : vector<1x128x128xbf16> to vector<128x128xbf16>
    %cst_41 = arith.constant dense<0.000000e+00> : vector<64x128xf32>
    %75 = tpu.matmul %72, %74, %cst_41 {dimension_numbers = #tpu.dot_dimension_numbers<[1], [0], [0], [1], [0, 0, 1, 1], [], []>} : vector<64x128xbf16>, vector<128x128xbf16>, vector<64x128xf32> -> vector<64x128xf32>
    %76 = arith.addf %70, %75 : vector<64x128xf32>
    %c17 = arith.constant 17 : index
    %c0_42 = arith.constant 0 : index
    %77 = vector.load %arg10[%c17, %c0_42] : memref<96x128xf32, #tpu.memory_space<vmem>>, vector<64x128xf32>
    %cst_43 = arith.constant 0.000000e+00 : f32
    %78 = vector.shape_cast %33 : vector<64x1xi1> to vector<64x1xi1>
    %79 = vector.broadcast %78 : vector<64x1xi1> to vector<64x128xi1>
    %80 = vector.broadcast %cst_43 : f32 to vector<64x128xf32>
    %81 = arith.select %79, %77, %80 : vector<64x128xi1>, vector<64x128xf32>
    %82 = arith.truncf %81 : vector<64x128xf32> to vector<64x128xbf16>
    %c5 = arith.constant 5 : index
    %c0_44 = arith.constant 0 : index
    %c0_45 = arith.constant 0 : index
    %83 = vector.load %arg4[%c5, %c0_44, %c0_45] : memref<9x128x128xbf16, #tpu.memory_space<vmem>>, vector<1x128x128xbf16>
    %84 = vector.shape_cast %83 : vector<1x128x128xbf16> to vector<128x128xbf16>
    %cst_46 = arith.constant dense<0.000000e+00> : vector<64x128xf32>
    %85 = tpu.matmul %82, %84, %cst_46 {dimension_numbers = #tpu.dot_dimension_numbers<[1], [0], [0], [1], [0, 0, 1, 1], [], []>} : vector<64x128xbf16>, vector<128x128xbf16>, vector<64x128xf32> -> vector<64x128xf32>
    %86 = arith.addf %76, %85 : vector<64x128xf32>
    %c23 = arith.constant 23 : index
    %c0_47 = arith.constant 0 : index
    %87 = vector.load %arg10[%c23, %c0_47] : memref<96x128xf32, #tpu.memory_space<vmem>>, vector<64x128xf32>
    %cst_48 = arith.constant 0.000000e+00 : f32
    %88 = vector.shape_cast %31 : vector<64x1xi1> to vector<64x1xi1>
    %89 = vector.broadcast %88 : vector<64x1xi1> to vector<64x128xi1>
    %90 = vector.broadcast %cst_48 : f32 to vector<64x128xf32>
    %91 = arith.select %89, %87, %90 : vector<64x128xi1>, vector<64x128xf32>
    %92 = arith.truncf %91 : vector<64x128xf32> to vector<64x128xbf16>
    %c6 = arith.constant 6 : index
    %c0_49 = arith.constant 0 : index
    %c0_50 = arith.constant 0 : index
    %93 = vector.load %arg4[%c6, %c0_49, %c0_50] : memref<9x128x128xbf16, #tpu.memory_space<vmem>>, vector<1x128x128xbf16>
    %94 = vector.shape_cast %93 : vector<1x128x128xbf16> to vector<128x128xbf16>
    %cst_51 = arith.constant dense<0.000000e+00> : vector<64x128xf32>
    %95 = tpu.matmul %92, %94, %cst_51 {dimension_numbers = #tpu.dot_dimension_numbers<[1], [0], [0], [1], [0, 0, 1, 1], [], []>} : vector<64x128xbf16>, vector<128x128xbf16>, vector<64x128xf32> -> vector<64x128xf32>
    %96 = arith.addf %86, %95 : vector<64x128xf32>
    %c24 = arith.constant 24 : index
    %c0_52 = arith.constant 0 : index
    %97 = vector.load %arg10[%c24, %c0_52] : memref<96x128xf32, #tpu.memory_space<vmem>>, vector<64x128xf32>
    %98 = arith.truncf %97 : vector<64x128xf32> to vector<64x128xbf16>
    %c7_53 = arith.constant 7 : index
    %c0_54 = arith.constant 0 : index
    %c0_55 = arith.constant 0 : index
    %99 = vector.load %arg4[%c7_53, %c0_54, %c0_55] : memref<9x128x128xbf16, #tpu.memory_space<vmem>>, vector<1x128x128xbf16>
    %100 = vector.shape_cast %99 : vector<1x128x128xbf16> to vector<128x128xbf16>
    %cst_56 = arith.constant dense<0.000000e+00> : vector<64x128xf32>
    %101 = tpu.matmul %98, %100, %cst_56 {dimension_numbers = #tpu.dot_dimension_numbers<[1], [0], [0], [1], [0, 0, 1, 1], [], []>} : vector<64x128xbf16>, vector<128x128xbf16>, vector<64x128xf32> -> vector<64x128xf32>
    %102 = arith.addf %96, %101 : vector<64x128xf32>
    %c25 = arith.constant 25 : index
    %c0_57 = arith.constant 0 : index
    %103 = vector.load %arg10[%c25, %c0_57] : memref<96x128xf32, #tpu.memory_space<vmem>>, vector<64x128xf32>
    %cst_58 = arith.constant 0.000000e+00 : f32
    %104 = vector.shape_cast %33 : vector<64x1xi1> to vector<64x1xi1>
    %105 = vector.broadcast %104 : vector<64x1xi1> to vector<64x128xi1>
    %106 = vector.broadcast %cst_58 : f32 to vector<64x128xf32>
    %107 = arith.select %105, %103, %106 : vector<64x128xi1>, vector<64x128xf32>
    %108 = arith.truncf %107 : vector<64x128xf32> to vector<64x128xbf16>
    %c8_59 = arith.constant 8 : index
    %c0_60 = arith.constant 0 : index
    %c0_61 = arith.constant 0 : index
    %109 = vector.load %arg4[%c8_59, %c0_60, %c0_61] : memref<9x128x128xbf16, #tpu.memory_space<vmem>>, vector<1x128x128xbf16>
    %110 = vector.shape_cast %109 : vector<1x128x128xbf16> to vector<128x128xbf16>
    %cst_62 = arith.constant dense<0.000000e+00> : vector<64x128xf32>
    %111 = tpu.matmul %108, %110, %cst_62 {dimension_numbers = #tpu.dot_dimension_numbers<[1], [0], [0], [1], [0, 0, 1, 1], [], []>} : vector<64x128xbf16>, vector<128x128xbf16>, vector<64x128xf32> -> vector<64x128xf32>
    %112 = arith.addf %102, %111 : vector<64x128xf32>
    %c0_63 = arith.constant 0 : index
    %c0_64 = arith.constant 0 : index
    %113 = vector.load %arg5[%c0_63, %c0_64] : memref<1x128xf32, #tpu.memory_space<vmem>>, vector<1x128xf32>
    %114 = vector.broadcast %113 : vector<1x128xf32> to vector<64x128xf32>
    %115 = arith.addf %112, %114 : vector<64x128xf32>
    %cst_65 = arith.constant 0.000000e+00 : f32
    %116 = vector.broadcast %cst_65 : f32 to vector<64x128xf32>
    %117 = arith.maximumf %115, %116 : vector<64x128xf32>
    %118 = arith.truncf %117 : vector<64x128xf32> to vector<64x128xbf16>
    %c0_66 = arith.constant 0 : index
    %c0_67 = arith.constant 0 : index
    %119 = vector.load %arg6[%c0_66, %c0_67] : memref<128x128xbf16, #tpu.memory_space<vmem>>, vector<128x128xbf16>
    %cst_68 = arith.constant dense<0.000000e+00> : vector<64x128xf32>
    %120 = tpu.matmul %118, %119, %cst_68 {dimension_numbers = #tpu.dot_dimension_numbers<[1], [0], [0], [1], [0, 0, 1, 1], [], []>} : vector<64x128xbf16>, vector<128x128xbf16>, vector<64x128xf32> -> vector<64x128xf32>
    %c0_69 = arith.constant 0 : index
    %c0_70 = arith.constant 0 : index
    %121 = vector.load %arg7[%c0_69, %c0_70] : memref<1x128xf32, #tpu.memory_space<vmem>>, vector<1x128xf32>
    %122 = vector.broadcast %121 : vector<1x128xf32> to vector<64x128xf32>
    %123 = arith.addf %120, %122 : vector<64x128xf32>
    %124 = arith.truncf %123 : vector<64x128xf32> to vector<64x128xbf16>
    %c0_71 = arith.constant 0 : index
    %c0_72 = arith.constant 0 : index
    %c0_73 = arith.constant 0 : index
    %125 = vector.load %arg8[%c0_71, %c0_72, %c0_73] : memref<1x64x128xbf16, #tpu.memory_space<vmem>>, vector<1x64x128xbf16>
    %126 = vector.shape_cast %125 : vector<1x64x128xbf16> to vector<64x128xbf16>
    %127 = vector.shape_cast %124 : vector<64x128xbf16> to vector<1x64x128xbf16>
    tpu.vector_store %arg8[%c0_71, %c0_72, %c0_73], %127 {strides = array<i32>} : memref<1x64x128xbf16, #tpu.memory_space<vmem>>, vector<1x64x128xbf16>,
    %cst_74 = arith.constant dense<0.000000e+00> : vector<128xf32>
    %128 = vector.multi_reduction <add>, %123, %cst_74 [0] : vector<64x128xf32> to vector<128xf32>
    %129 = vector.shape_cast %128 : vector<128xf32> to vector<1x128xf32>
    %c0_75 = arith.constant 0 : index
    %c0_76 = arith.constant 0 : index
    %c0_77 = arith.constant 0 : index
    %130 = vector.load %arg9[%c0_75, %c0_76, %c0_77] : memref<1x1x128xf32, #tpu.memory_space<vmem>>, vector<1x1x128xf32>
    %131 = vector.shape_cast %130 : vector<1x1x128xf32> to vector<1x128xf32>
    %132 = vector.shape_cast %129 : vector<1x128xf32> to vector<1x1x128xf32>
    tpu.vector_store %arg9[%c0_75, %c0_76, %c0_77], %132 {strides = array<i32>} : memref<1x1x128xf32, #tpu.memory_space<vmem>>, vector<1x1x128xf32>,
    return
  }
  func.func @transform_0(%arg0: i32) -> (i32, i32, i32) {
    %c0_i32 = arith.constant 0 : i32
    %c0_i32_0 = arith.constant 0 : i32
    %c0_i32_1 = arith.constant 0 : i32
    return %arg0, %c0_i32, %c0_i32_0 : i32, i32, i32
  }
  func.func @transform_1(%arg0: i32) -> (i32, i32) {
    %c0_i32 = arith.constant 0 : i32
    %c0_i32_0 = arith.constant 0 : i32
    %c0_i32_1 = arith.constant 0 : i32
    return %c0_i32, %c0_i32_0 : i32, i32
  }
  func.func @transform_2(%arg0: i32) -> (i32, i32) {
    %c0_i32 = arith.constant 0 : i32
    %c0_i32_0 = arith.constant 0 : i32
    %c0_i32_1 = arith.constant 0 : i32
    return %c0_i32, %c0_i32_0 : i32, i32
  }
  func.func @transform_3(%arg0: i32) -> (i32, i32, i32) {
    %c0_i32 = arith.constant 0 : i32
    %c0_i32_0 = arith.constant 0 : i32
    %c0_i32_1 = arith.constant 0 : i32
    %c0_i32_2 = arith.constant 0 : i32
    return %c0_i32, %c0_i32_0, %c0_i32_1 : i32, i32, i32
  }
  func.func @transform_4(%arg0: i32) -> (i32, i32) {
    %c0_i32 = arith.constant 0 : i32
    %c0_i32_0 = arith.constant 0 : i32
    %c0_i32_1 = arith.constant 0 : i32
    return %c0_i32, %c0_i32_0 : i32, i32
  }
  func.func @transform_5(%arg0: i32) -> (i32, i32) {
    %c0_i32 = arith.constant 0 : i32
    %c0_i32_0 = arith.constant 0 : i32
    %c0_i32_1 = arith.constant 0 : i32
    return %c0_i32, %c0_i32_0 : i32, i32
  }
  func.func @transform_6(%arg0: i32) -> (i32, i32) {
    %c0_i32 = arith.constant 0 : i32
    %c0_i32_0 = arith.constant 0 : i32
    %c0_i32_1 = arith.constant 0 : i32
    return %c0_i32, %c0_i32_0 : i32, i32
  }
  func.func @transform_7(%arg0: i32) -> (i32, i32, i32) {
    %c0_i32 = arith.constant 0 : i32
    %c0_i32_0 = arith.constant 0 : i32
    %c0_i32_1 = arith.constant 0 : i32
    return %arg0, %c0_i32, %c0_i32_0 : i32, i32, i32
  }
  func.func @transform_8(%arg0: i32) -> (i32, i32, i32) {
    %c0_i32 = arith.constant 0 : i32
    %c0_i32_0 = arith.constant 0 : i32
    %c0_i32_1 = arith.constant 0 : i32
    return %arg0, %c0_i32, %c0_i32_0 : i32, i32, i32
  }
}

module attributes {stable_mosaic.version = 11 : i64} {
  func.func @_tail_kernel(%arg0: i32, %arg1: i32, %arg2: memref<1x64x128xbf16, #tpu.memory_space<vmem>>, %arg3: memref<1x1x128xf32, #tpu.memory_space<vmem>>, %arg4: memref<1x64x128xbf16, #tpu.memory_space<vmem>>, %arg5: memref<1x64x128xbf16, #tpu.memory_space<vmem>>) attributes {dimension_semantics = [#tpu.dimension_semantics<parallel>, #tpu.dimension_semantics<parallel>], iteration_bounds = array<i64: 2, 1>, scalar_prefetch = 0 : i64, scratch_operands = 0 : i64, tpu.core_type = #tpu.core_type<tc>, window_params = [{transform_indices = @transform_0, window_bounds = array<i64: 1, 64, 128>}, {transform_indices = @transform_1, window_bounds = array<i64: 1, 1, 128>}, {transform_indices = @transform_2, window_bounds = array<i64: 1, 64, 128>}, {transform_indices = @transform_3, window_bounds = array<i64: 1, 64, 128>}]} {
    %c0 = arith.constant 0 : index
    %c0_0 = arith.constant 0 : index
    %c0_1 = arith.constant 0 : index
    %0 = vector.load %arg2[%c0, %c0_0, %c0_1] : memref<1x64x128xbf16, #tpu.memory_space<vmem>>, vector<1x64x128xbf16>
    %1 = vector.shape_cast %0 : vector<1x64x128xbf16> to vector<64x128xbf16>
    %2 = arith.extf %1 : vector<64x128xbf16> to vector<64x128xf32>
    %c0_2 = arith.constant 0 : index
    %c0_3 = arith.constant 0 : index
    %c0_4 = arith.constant 0 : index
    %3 = vector.load %arg3[%c0_2, %c0_3, %c0_4] : memref<1x1x128xf32, #tpu.memory_space<vmem>>, vector<1x1x128xf32>
    %4 = vector.shape_cast %3 : vector<1x1x128xf32> to vector<1x128xf32>
    %5 = vector.broadcast %4 : vector<1x128xf32> to vector<64x128xf32>
    %6 = arith.mulf %2, %5 : vector<64x128xf32>
    %c0_5 = arith.constant 0 : index
    %c0_6 = arith.constant 0 : index
    %c0_7 = arith.constant 0 : index
    %7 = vector.load %arg4[%c0_5, %c0_6, %c0_7] : memref<1x64x128xbf16, #tpu.memory_space<vmem>>, vector<1x64x128xbf16>
    %8 = vector.shape_cast %7 : vector<1x64x128xbf16> to vector<64x128xbf16>
    %9 = arith.extf %8 : vector<64x128xbf16> to vector<64x128xf32>
    %10 = arith.addf %6, %9 : vector<64x128xf32>
    %cst = arith.constant 0.000000e+00 : f32
    %11 = vector.broadcast %cst : f32 to vector<64x128xf32>
    %12 = arith.maximumf %10, %11 : vector<64x128xf32>
    %13 = arith.truncf %12 : vector<64x128xf32> to vector<64x128xbf16>
    %c0_8 = arith.constant 0 : index
    %c0_9 = arith.constant 0 : index
    %c0_10 = arith.constant 0 : index
    %14 = vector.load %arg5[%c0_8, %c0_9, %c0_10] : memref<1x64x128xbf16, #tpu.memory_space<vmem>>, vector<1x64x128xbf16>
    %15 = vector.shape_cast %14 : vector<1x64x128xbf16> to vector<64x128xbf16>
    %16 = vector.shape_cast %13 : vector<64x128xbf16> to vector<1x64x128xbf16>
    tpu.vector_store %arg5[%c0_8, %c0_9, %c0_10], %16 {strides = array<i32>} : memref<1x64x128xbf16, #tpu.memory_space<vmem>>, vector<1x64x128xbf16>,
    return
  }
  func.func @transform_0(%arg0: i32, %arg1: i32) -> (i32, i32, i32) {
    %c0_i32 = arith.constant 0 : i32
    %c0_i32_0 = arith.constant 0 : i32
    return %arg0, %arg1, %c0_i32 : i32, i32, i32
  }
  func.func @transform_1(%arg0: i32, %arg1: i32) -> (i32, i32, i32) {
    %c0_i32 = arith.constant 0 : i32
    %c0_i32_0 = arith.constant 0 : i32
    %c0_i32_1 = arith.constant 0 : i32
    return %arg0, %c0_i32, %c0_i32_0 : i32, i32, i32
  }
  func.func @transform_2(%arg0: i32, %arg1: i32) -> (i32, i32, i32) {
    %c0_i32 = arith.constant 0 : i32
    %c0_i32_0 = arith.constant 0 : i32
    return %arg0, %arg1, %c0_i32 : i32, i32, i32
  }
  func.func @transform_3(%arg0: i32, %arg1: i32) -> (i32, i32, i32) {
    %c0_i32 = arith.constant 0 : i32
    %c0_i32_0 = arith.constant 0 : i32
    return %arg0, %arg1, %c0_i32 : i32, i32, i32
  }
}

</mosaic_0001>

<llo_original>
// kernel: bottleneckx_forward.3
$region0: #{bottleneckx_forward.3}
  #allocation0 [shape = 'u32[]', space=smem, size = 0x4, offset = 0x4, fixed_abs, tag = 'smem constant byte address 0x4 - core index']
  #allocation1 [shape = 'u32[72,128]{1,0:T(1,128)}', space=vmem, size = 0x9000, scoped, tag = 'internal scratch']
  %s0 = inlined_call_operand.vmem [shape: bf16[2,64,128], index: 0, kind: input, shape index: {}]
  %s1 = inlined_call_operand.vmem [shape: f32[2,1,128], index: 1, kind: input, shape index: {}]
  %s2 = inlined_call_operand.vmem [shape: bf16[2,64,128], index: 2, kind: input, shape index: {}]
  %s3 = inlined_call_operand.vmem [shape: bf16[2,64,128], index: 3, kind: output, shape index: {}]
  %s4 = sld [smem:[#allocation0]]
  $region45: #{bottleneckx_forward.3} parent=0
    _
  %s6 = ssub.s32 1, %s4
  %s7 = scalar_select 0, %s6, %s4
  loop: start=0, step=1, limit=4
  $region2: #{bottleneckx_forward.3} parent=0 // loop_pre_header
    _
  $region3: #{bottleneckx_forward.3} parent=0 // loop_header
    %s9 = sphi 0, %s13
    %p10 = scmp.ge.s32.totalorder %s9, 4
    %s16 = sphi 0, %s28
    %s17 = sphi 0, %s24
    %s18 = sphi 0, %s16
    %s19 = sphi 0, %s17
    %s20 = sphi 0, %s18
    %s21 = sphi 0, %s19
    %s33 = sphi 0, %s35
    %s36 = sphi 0, %s33
    %s37 = sphi 0, %s36
    %s53 = sphi 0, %s37
    %s59 = sphi 0, %s61
    %s62 = sphi 0, %s59
    %s63 = sphi 0, %s62
    %s79 = sphi 0, %s63
    %s87 = sphi 0, %s89
    %s90 = sphi 0, %s87
    %s91 = sphi 0, %s90
    %s107 = sphi 0, %s91
    %s115 = sphi 0, %s117
    %s118 = sphi 0, %s115
    %s119 = sphi 0, %s118
    %s135 = sphi 0, %s119
  $region4: #{bottleneckx_forward.3} parent=0 // loop_header_branch
    %12 = sbr.rel (%p10) target = $region8
  $region5: #{bottleneckx_forward.3} parent=0 // loop_body
    %s14 = ssub.s32 %s9, 1
    %s15 = ssub.s32 %s9, 2
    %s22 = sadd.s32 1, %s17
    %p23 = scmp.ge.s32.totalorder %s22, 1
    %s24 = scalar_select %p23, 0, %s22
    %s25 = sadd.s32 1, %s16
    %s26 = scalar_select %p23, %s25, %s16
    %p27 = scmp.ge.s32.totalorder %s26, 2
    %s28 = scalar_select %p27, 0, %s26
    %s29 = ssub.s32 %s16, %s28
    %s30 = ssub.s32 %s17, %s24
    %s31 = sor.u32 %s29, %s30
    %p32 = scmp.eq.s32.totalorder %s31, 0
    %s34 = sadd.s32 %s33, 1
    %s35 = scalar_select %p32, %s33, %s34
    %p38 = pneg %p32
    %p39 = scmp.eq.s32.totalorder %s9, 1
    %p40 = por %p38, %p39
    %p41 = scmp.ne.s32.totalorder %s33, %s36
    %p42 = scmp.eq.s32.totalorder %s9, 0
    %p43 = por %p41, %p42
    %p44 = scmp.ne.s32.totalorder %s33, %s36
    %p45 = scmp.eq.s32.totalorder %s14, 1
    %p46 = por %p44, %p45
    %p47 = scmp.ne.s32.totalorder %s36, %s37
    %p48 = scmp.eq.s32.totalorder %s14, 0
    %p49 = por %p47, %p48
    %p50 = scmp.ne.s32.totalorder %s36, %s37
    %p51 = scmp.eq.s32.totalorder %s15, 1
    %p52 = por %p50, %p51
    %p54 = scmp.ne.s32.totalorder %s37, %s53
    %p55 = scmp.eq.s32.totalorder %s15, 0
    %p56 = por %p54, %p55
    %s57 = ssub.s32 %s16, %s28
    %p58 = scmp.eq.s32.totalorder %s57, 0
    %s60 = sadd.s32 %s59, 1
    %s61 = scalar_select %p58, %s59, %s60
    %p64 = pneg %p58
    %p65 = scmp.eq.s32.totalorder %s9, 1
    %p66 = por %p64, %p65
    %p67 = scmp.ne.s32.totalorder %s59, %s62
    %p68 = scmp.eq.s32.totalorder %s9, 0
    %p69 = por %p67, %p68
    %p70 = scmp.ne.s32.totalorder %s59, %s62
    %p71 = scmp.eq.s32.totalorder %s14, 1
    %p72 = por %p70, %p71
    %p73 = scmp.ne.s32.totalorder %s62, %s63
    %p74 = scmp.eq.s32.totalorder %s14, 0
    %p75 = por %p73, %p74
    %p76 = scmp.ne.s32.totalorder %s62, %s63
    %p77 = scmp.eq.s32.totalorder %s15, 1
    %p78 = por %p76, %p77
    %p80 = scmp.ne.s32.totalorder %s63, %s79
    %p81 = scmp.eq.s32.totalorder %s15, 0
    %p82 = por %p80, %p81
    %s83 = ssub.s32 %s16, %s28
    %s84 = ssub.s32 %s17, %s24
    %s85 = sor.u32 %s83, %s84
    %p86 = scmp.eq.s32.totalorder %s85, 0
    %s88 = sadd.s32 %s87, 1
    %s89 = scalar_select %p86, %s87, %s88
    %p92 = pneg %p86
    %p93 = scmp.eq.s32.totalorder %s9, 1
    %p94 = por %p92, %p93
    %p95 = scmp.ne.s32.totalorder %s87, %s90
    %p96 = scmp.eq.s32.totalorder %s9, 0
    %p97 = por %p95, %p96
    %p98 = scmp.ne.s32.totalorder %s87, %s90
    %p99 = scmp.eq.s32.totalorder %s14, 1
    %p100 = por %p98, %p99
    %p101 = scmp.ne.s32.totalorder %s90, %s91
    %p102 = scmp.eq.s32.totalorder %s14, 0
    %p103 = por %p101, %p102
    %p104 = scmp.ne.s32.totalorder %s90, %s91
    %p105 = scmp.eq.s32.totalorder %s15, 1
    %p106 = por %p104, %p105
    %p108 = scmp.ne.s32.totalorder %s91, %s107
    %p109 = scmp.eq.s32.totalorder %s15, 0
    %p110 = por %p108, %p109
    %s111 = ssub.s32 %s16, %s28
    %s112 = ssub.s32 %s17, %s24
    %s113 = sor.u32 %s111, %s112
    %p114 = scmp.eq.s32.totalorder %s113, 0
    %s116 = sadd.s32 %s115, 1
    %s117 = scalar_select %p114, %s115, %s116
    %p120 = pneg %p114
    %p121 = scmp.eq.s32.totalorder %s9, 1
    %p122 = por %p120, %p121
    %p123 = scmp.ne.s32.totalorder %s115, %s118
    %p124 = scmp.eq.s32.totalorder %s9, 0
    %p125 = por %p123, %p124
    %p126 = scmp.ne.s32.totalorder %s115, %s118
    %p127 = scmp.eq.s32.totalorder %s14, 1
    %p128 = por %p126, %p127
    %p129 = scmp.ne.s32.totalorder %s118, %s119
    %p130 = scmp.eq.s32.totalorder %s14, 0
    %p131 = por %p129, %p130
    %p132 = scmp.ne.s32.totalorder %s118, %s119
    %p133 = scmp.eq.s32.totalorder %s15, 1
    %p134 = por %p132, %p133
    %p136 = scmp.ne.s32.totalorder %s119, %s135
    %p137 = scmp.eq.s32.totalorder %s15, 0
    %p138 = por %p136, %p137
    %p139 = scmp.le.s32.totalorder 1, %s9
    %p140 = scmp.lt.s32.totalorder %s9, 3
    %p141 = pnand %p139, %p140
    %p142 = pneg %p141
    // Predicated region
    $region9: #{bottleneckx_forward.3} parent=5 // pred_check
      _
    $region10: #{bottleneckx_forward.3} parent=5 // pred_check_branch
      %144 = sbr.rel (%p141) target = $region12
    $region11: #{bottleneckx_forward.3} parent=5 // pred_region
      %s145 = ssub.s32 %s9, 1
    $region12: #{bottleneckx_forward.3} parent=5 // pred_fallthru
      _
    %p146 = scmp.lt.s32.totalorder %s9, 2
    // Predicated region
    $region13: #{bottleneckx_forward.3} parent=5 // pred_check
      %p147 = pneg %p146
    $region14: #{bottleneckx_forward.3} parent=5 // pred_check_branch
      %149 = sbr.rel (%p147) target = $region16
    $region15: #{bottleneckx_forward.3} parent=5 // pred_region
      // Predicated region
      $region17: #{bottleneckx_forward.3} parent=15 // pred_check
        %p150 = pneg %p43
      $region18: #{bottleneckx_forward.3} parent=15 // pred_check_branch
        %152 = sbr.rel (%p150) target = $region20
      $region19: #{bottleneckx_forward.3} parent=15 // pred_region
        %s153 = smul.u32 8, %s17
        %p154 = scmp.lt.s32.totalorder %s16, 1
        %s155 = scalar_select %p154, %s16, 1
        %p156 = scmp.lt.s32.totalorder %s153, 7
        %s157 = scalar_select %p156, %s153, 7
        %s158 = smul.addr %s155, 8
        %s159 = sadd.s32 %s157, %s158
        %s160 = smul.addr %s159, 4
        %s161 = scalar_lea.vmem %s0, %s160
        %s162 = smul.u32 8, %s17
      $region20: #{bottleneckx_forward.3} parent=15 // pred_fallthru
        _
      // Predicated region
      $region21: #{bottleneckx_forward.3} parent=15 // pred_check
        %p163 = pneg %p69
      $region22: #{bottleneckx_forward.3} parent=15 // pred_check_branch
        %165 = sbr.rel (%p163) target = $region24
      $region23: #{bottleneckx_forward.3} parent=15 // pred_region
        %p166 = scmp.lt.s32.totalorder %s16, 1
        %s167 = scalar_select %p166, %s16, 1
        %s168 = scalar_lea.vmem %s1, %s167
      $region24: #{bottleneckx_forward.3} parent=15 // pred_fallthru
        _
      // Predicated region
      $region25: #{bottleneckx_forward.3} parent=15 // pred_check
        %p169 = pneg %p97
      $region26: #{bottleneckx_forward.3} parent=15 // pred_check_branch
        %171 = sbr.rel (%p169) target = $region28
      $region27: #{bottleneckx_forward.3} parent=15 // pred_region
        %s172 = smul.u32 8, %s17
        %p173 = scmp.lt.s32.totalorder %s16, 1
        %s174 = scalar_select %p173, %s16, 1
        %p175 = scmp.lt.s32.totalorder %s172, 7
        %s176 = scalar_select %p175, %s172, 7
        %s177 = smul.addr %s174, 8
        %s178 = sadd.s32 %s176, %s177
        %s179 = smul.addr %s178, 4
        %s180 = scalar_lea.vmem %s2, %s179
        %s181 = smul.u32 8, %s17
      $region28: #{bottleneckx_forward.3} parent=15 // pred_fallthru
        _
    $region16: #{bottleneckx_forward.3} parent=5 // pred_fallthru
      _
    %p182 = scmp.le.s32.totalorder 1, %s9
    %p183 = scmp.lt.s32.totalorder %s9, 3
    %p184 = pnand %p182, %p183
    %p185 = pneg %p184
    // Predicated region
    $region29: #{bottleneckx_forward.3} parent=5 // pred_check
      _
    $region30: #{bottleneckx_forward.3} parent=5 // pred_check_branch
      %187 = sbr.rel (%p184) target = $region32
    $region31: #{bottleneckx_forward.3} parent=5 // pred_region
      %s188 = ssub.s32 %s9, 1
      %s189 = smul.u32 8, %s19
      %p190 = scmp.lt.s32.totalorder %s18, 1
      %s191 = scalar_select %p190, %s18, 1
      %p192 = scmp.lt.s32.totalorder %s189, 7
      %s193 = scalar_select %p192, %s189, 7
      %s194 = smul.addr %s191, 8
      %s195 = sadd.s32 %s193, %s194
      %s196 = smul.addr %s195, 4
      %s197 = scalar_lea.vmem %s0, %s196
      %p198 = pneg %p49
      %p199 = pneg %p46
      %p200 = scmp.lt.s32.totalorder %s18, 1
      %s201 = scalar_select %p200, %s18, 1
      %s202 = scalar_lea.vmem %s1, %s201
      %p203 = pneg %p75
      %p204 = pneg %p72
      %s205 = smul.u32 8, %s19
      %p206 = scmp.lt.s32.totalorder %s18, 1
      %s207 = scalar_select %p206, %s18, 1
      %p208 = scmp.lt.s32.totalorder %s205, 7
      %s209 = scalar_select %p208, %s205, 7
      %s210 = smul.addr %s207, 8
      %s211 = sadd.s32 %s209, %s210
      %s212 = smul.addr %s211, 4
      %s213 = scalar_lea.vmem %s2, %s212
      %p214 = pneg %p103
      %p215 = pneg %p100
      %p216 = pneg %p131
      %p217 = pneg %p128
      %s218 = smul.u32 8, %s19
      %p219 = scmp.lt.s32.totalorder %s18, 1
      %s220 = scalar_select %p219, %s18, 1
      %p221 = scmp.lt.s32.totalorder %s218, 7
      %s222 = scalar_select %p221, %s218, 7
      %s223 = smul.addr %s220, 8
      %s224 = sadd.s32 %s222, %s223
      %s225 = smul.addr %s224, 4
      %s226 = scalar_lea.vmem %s3, %s225
      %s227 = smul.u32 8, %s19
      %p228 = scmp.lt.s32.totalorder %s18, 1
      %s229 = scalar_select %p228, %s18, 1
      %p230 = scmp.lt.s32.totalorder %s227, 7
      %s231 = scalar_select %p230, %s227, 7
      %s232 = smul.addr %s229, 8
      %s233 = sadd.s32 %s231, %s232
      %s234 = smul.addr %s233, 4
      %s235 = scalar_lea.vmem %s0, %s234
      %s236 = smul.u32 8, %s19
      %p237 = scmp.lt.s32.totalorder %s18, 1
      %s238 = scalar_select %p237, %s18, 1
      %s239 = scalar_lea.vmem %s1, %s238
      %s240 = smul.u32 8, %s19
      %p241 = scmp.lt.s32.totalorder %s18, 1
      %s242 = scalar_select %p241, %s18, 1
      %p243 = scmp.lt.s32.totalorder %s240, 7
      %s244 = scalar_select %p243, %s240, 7
      %s245 = smul.addr %s242, 8
      %s246 = sadd.s32 %s244, %s245
      %s247 = smul.addr %s246, 4
      %s248 = scalar_lea.vmem %s2, %s247
      %s249 = smul.u32 8, %s19
      %s250 = smul.u32 8, %s19
      %p251 = scmp.lt.s32.totalorder %s18, 1
      %s252 = scalar_select %p251, %s18, 1
      %p253 = scmp.lt.s32.totalorder %s250, 7
      %s254 = scalar_select %p253, %s250, 7
      %s255 = smul.addr %s252, 8
      %s256 = sadd.s32 %s254, %s255
      %s257 = smul.addr %s256, 4
      %s258 = scalar_lea.vmem %s3, %s257
      %s259 = smul.u32 8, %s19
      %v260 = vld [vmem:[%s235] sm:$0xf]
      %v261 = vld [vmem:[%s235 + $0x4] sm:$0xf]
      %v262 = vld [vmem:[%s235 + $0x8] sm:$0xf]
      %v263 = vld [vmem:[%s235 + $0xc] sm:$0xf]
      %v264 = vld [vmem:[%s235 + $0x10] sm:$0xf]
      %v265 = vld [vmem:[%s235 + $0x14] sm:$0xf]
      %v266 = vld [vmem:[%s235 + $0x18] sm:$0xf]
      %v267 = vld [vmem:[%s235 + $0x1c] sm:$0xf]
      %v268 = vunpack.c.l.bf16 %v260
      %v269 = vunpack.c.l.bf16 %v261
      %v270 = vunpack.c.l.bf16 %v262
      %v271 = vunpack.c.l.bf16 %v263
      %v272 = vunpack.c.l.bf16 %v264
      %v273 = vunpack.c.l.bf16 %v265
      %v274 = vunpack.c.l.bf16 %v266
      %v275 = vunpack.c.l.bf16 %v267
      %v276 = vld [vmem:[%s239] sm:$0x1]
      %v278 = vperm.slane %v276, 0
      %v280 = vmul.f32 %v268, %v278
      %v281 = vmul.f32 %v269, %v278
      %v282 = vmul.f32 %v270, %v278
      %v283 = vmul.f32 %v271, %v278
      %v284 = vmul.f32 %v272, %v278
      %v285 = vmul.f32 %v273, %v278
      %v286 = vmul.f32 %v274, %v278
      %v287 = vmul.f32 %v275, %v278
      %v288 = vld [vmem:[%s248] sm:$0xf]
      %v289 = vld [vmem:[%s248 + $0x4] sm:$0xf]
      %v290 = vld [vmem:[%s248 + $0x8] sm:$0xf]
      %v291 = vld [vmem:[%s248 + $0xc] sm:$0xf]
      %v292 = vld [vmem:[%s248 + $0x10] sm:$0xf]
      %v293 = vld [vmem:[%s248 + $0x14] sm:$0xf]
      %v294 = vld [vmem:[%s248 + $0x18] sm:$0xf]
      %v295 = vld [vmem:[%s248 + $0x1c] sm:$0xf]
      %v296 = vunpack.c.l.bf16 %v288
      %v297 = vunpack.c.l.bf16 %v289
      %v298 = vunpack.c.l.bf16 %v290
      %v299 = vunpack.c.l.bf16 %v291
      %v300 = vunpack.c.l.bf16 %v292
      %v301 = vunpack.c.l.bf16 %v293
      %v302 = vunpack.c.l.bf16 %v294
      %v303 = vunpack.c.l.bf16 %v295
      %v304 = vadd.f32 %v280, %v296
      %v305 = vadd.f32 %v281, %v297
      %v306 = vadd.f32 %v282, %v298
      %v307 = vadd.f32 %v283, %v299
      %v308 = vadd.f32 %v284, %v300
      %v309 = vadd.f32 %v285, %v301
      %v310 = vadd.f32 %v286, %v302
      %v311 = vadd.f32 %v287, %v303
      %v312 = vmax.f32 %v304, 0.0
      %v313 = vmax.f32 %v305, 0.0
      %v314 = vmax.f32 %v306, 0.0
      %v315 = vmax.f32 %v307, 0.0
      %v316 = vmax.f32 %v308, 0.0
      %v317 = vmax.f32 %v309, 0.0
      %v318 = vmax.f32 %v310, 0.0
      %v319 = vmax.f32 %v311, 0.0
      %v320 = vpack.c.bf16 %v312, %v312
      %v321 = vpack.c.bf16 %v313, %v313
      %v322 = vpack.c.bf16 %v314, %v314
      %v323 = vpack.c.bf16 %v315, %v315
      %v324 = vpack.c.bf16 %v316, %v316
      %v325 = vpack.c.bf16 %v317, %v317
      %v326 = vpack.c.bf16 %v318, %v318
      %v327 = vpack.c.bf16 %v319, %v319
      %328 = vst [vmem:[%s258] sm:$0xf] %v320
      %329 = vst [vmem:[%s258 + $0x4] sm:$0xf] %v321
      %330 = vst [vmem:[%s258 + $0x8] sm:$0xf] %v322
      %331 = vst [vmem:[%s258 + $0xc] sm:$0xf] %v323
      %332 = vst [vmem:[%s258 + $0x10] sm:$0xf] %v324
      %333 = vst [vmem:[%s258 + $0x14] sm:$0xf] %v325
      %334 = vst [vmem:[%s258 + $0x18] sm:$0xf] %v326
      %335 = vst [vmem:[%s258 + $0x1c] sm:$0xf] %v327
      %s336 = smul.u32 8, %s19
      %p337 = scmp.lt.s32.totalorder %s18, 1
      %s338 = scalar_select %p337, %s18, 1
      %p339 = scmp.lt.s32.totalorder %s336, 7
      %s340 = scalar_select %p339, %s336, 7
      %s341 = smul.addr %s338, 8
      %s342 = sadd.s32 %s340, %s341
      %s343 = smul.addr %s342, 4
      %s344 = scalar_lea.vmem %s3, %s343
      // Predicated region
      $region33: #{bottleneckx_forward.3} parent=31 // pred_check
        %p345 = pneg %p128
      $region34: #{bottleneckx_forward.3} parent=31 // pred_check_branch
        %347 = sbr.rel (%p345) target = $region36
      $region35: #{bottleneckx_forward.3} parent=31 // pred_region
        %s348 = smul.u32 8, %s19
      $region36: #{bottleneckx_forward.3} parent=31 // pred_fallthru
        _
    $region32: #{bottleneckx_forward.3} parent=5 // pred_fallthru
      _
    %p349 = scmp.le.s32.totalorder 2, %s9
    // Predicated region
    $region37: #{bottleneckx_forward.3} parent=5 // pred_check
      %p350 = pneg %p349
    $region38: #{bottleneckx_forward.3} parent=5 // pred_check_branch
      %352 = sbr.rel (%p350) target = $region40
    $region39: #{bottleneckx_forward.3} parent=5 // pred_region
      %s353 = ssub.s32 %s9, 2
      // Predicated region
      $region41: #{bottleneckx_forward.3} parent=39 // pred_check
        %p354 = pneg %p134
      $region42: #{bottleneckx_forward.3} parent=39 // pred_check_branch
        %356 = sbr.rel (%p354) target = $region44
      $region43: #{bottleneckx_forward.3} parent=39 // pred_region
        %s357 = smul.u32 8, %s21
        %p358 = scmp.lt.s32.totalorder %s20, 1
        %s359 = scalar_select %p358, %s20, 1
        %p360 = scmp.lt.s32.totalorder %s357, 7
        %s361 = scalar_select %p360, %s357, 7
        %s362 = smul.addr %s359, 8
        %s363 = sadd.s32 %s361, %s362
        %s364 = smul.addr %s363, 4
        %s365 = scalar_lea.vmem %s3, %s364
      $region44: #{bottleneckx_forward.3} parent=39 // pred_fallthru
        _
    $region40: #{bottleneckx_forward.3} parent=5 // pred_fallthru
      _
  $region6: #{bottleneckx_forward.3} parent=0 // loop_footer
    %s13 = sadd.s32 1, %s9
  $region7: #{bottleneckx_forward.3} parent=0 // loop_footer_branch
    %8 = sbr.rel target = $region3
  $region8: #{bottleneckx_forward.3} parent=0 // loop_exit
    _

// kernel: bottleneckx_forward.2
$region0: #{bottleneckx_forward.2}
  #allocation0 [shape = 'u32[]', space=smem, size = 0x4, offset = 0x4, fixed_abs, tag = 'smem constant byte address 0x4 - core index']
  #allocation1 [shape = 'u32[72,128]{1,0:T(1,128)}', space=vmem, size = 0x9000, scoped, tag = 'internal scratch']
  #allocation2 [shape = 'f32[96,128]{1,0:T(8,128)}', space=vmem, size = 0xc000, scoped, tag = 'scratch operand']
  %s0 = inlined_call_operand.vmem [shape: bf16[2,64,128], index: 0, kind: input, shape index: {}]
  %s1 = inlined_call_operand.vmem [shape: bf16[128,128], index: 1, kind: input, shape index: {}]
  %s2 = inlined_call_operand.vmem [shape: f32[1,128], index: 2, kind: input, shape index: {}]
  %s3 = inlined_call_operand.vmem [shape: bf16[9,128,128], index: 3, kind: input, shape index: {}]
  %s4 = inlined_call_operand.vmem [shape: f32[1,128], index: 4, kind: input, shape index: {}]
  %s5 = inlined_call_operand.vmem [shape: bf16[128,128], index: 5, kind: input, shape index: {}]
  %s6 = inlined_call_operand.vmem [shape: f32[1,128], index: 6, kind: input, shape index: {}]
  %s7 = inlined_call_operand.vmem [shape: bf16[2,64,128], index: 7, kind: output, shape index: {0}]
  %s8 = inlined_call_operand.vmem [shape: f32[2,1,128], index: 8, kind: output, shape index: {1}]
  %9 = xla_tuple %s7, %s8
  %s10 = sld [smem:[#allocation0]]
  $region69: #{bottleneckx_forward.2} parent=0
    _
  %s12 = ssub.s32 1, %s10
  %s13 = scalar_select 0, %s12, %s10
  loop: start=0, step=1, limit=4
  $region2: #{bottleneckx_forward.2} parent=0 // loop_pre_header
    _
  $region3: #{bottleneckx_forward.2} parent=0 // loop_header
    %s15 = sphi 0, %s19
    %p16 = scmp.ge.s32.totalorder %s15, 4
    %s25 = sphi 0, %s27
    %s28 = sphi 0, %s25
    %s29 = sphi 0, %s28
    %s45 = sphi 0, %s29
    %s49 = sphi 0, %s49
    %s51 = sphi 0, %s49
    %s52 = sphi 0, %s51
    %s66 = sphi 0, %s52
    %s70 = sphi 0, %s70
    %s72 = sphi 0, %s70
    %s73 = sphi 0, %s72
    %s87 = sphi 0, %s73
    %s91 = sphi 0, %s91
    %s93 = sphi 0, %s91
    %s94 = sphi 0, %s93
    %s108 = sphi 0, %s94
    %s112 = sphi 0, %s112
    %s114 = sphi 0, %s112
    %s115 = sphi 0, %s114
    %s129 = sphi 0, %s115
    %s133 = sphi 0, %s133
    %s135 = sphi 0, %s133
    %s136 = sphi 0, %s135
    %s150 = sphi 0, %s136
    %s154 = sphi 0, %s154
    %s156 = sphi 0, %s154
    %s157 = sphi 0, %s156
    %s171 = sphi 0, %s157
    %s177 = sphi 0, %s179
    %s180 = sphi 0, %s177
    %s181 = sphi 0, %s180
    %s197 = sphi 0, %s181
    %s203 = sphi 0, %s205
    %s206 = sphi 0, %s203
    %s207 = sphi 0, %s206
    %s223 = sphi 0, %s207
  $region4: #{bottleneckx_forward.2} parent=0 // loop_header_branch
    %18 = sbr.rel (%p16) target = $region8
  $region5: #{bottleneckx_forward.2} parent=0 // loop_body
    %s20 = ssub.s32 %s15, 1
    %s21 = ssub.s32 %s15, 2
    %s22 = sadd.s32 %s15, 1
    %s23 = ssub.s32 %s15, %s22
    %p24 = scmp.eq.s32.totalorder %s23, 0
    %s26 = sadd.s32 %s25, 1
    %s27 = scalar_select %p24, %s25, %s26
    %p30 = pneg %p24
    %p31 = scmp.eq.s32.totalorder %s15, 1
    %p32 = por %p30, %p31
    %p33 = scmp.ne.s32.totalorder %s25, %s28
    %p34 = scmp.eq.s32.totalorder %s15, 0
    %p35 = por %p33, %p34
    %p36 = scmp.ne.s32.totalorder %s25, %s28
    %p37 = scmp.eq.s32.totalorder %s20, 1
    %p38 = por %p36, %p37
    %p39 = scmp.ne.s32.totalorder %s28, %s29
    %p40 = scmp.eq.s32.totalorder %s20, 0
    %p41 = por %p39, %p40
    %p42 = scmp.ne.s32.totalorder %s28, %s29
    %p43 = scmp.eq.s32.totalorder %s21, 1
    %p44 = por %p42, %p43
    %p46 = scmp.ne.s32.totalorder %s29, %s45
    %p47 = scmp.eq.s32.totalorder %s21, 0
    %p48 = por %p46, %p47
    %s50 = sadd.s32 %s49, 1
    %p53 = scmp.eq.s32.totalorder %s15, 1
    %p54 = scmp.ne.s32.totalorder %s49, %s51
    %p55 = scmp.eq.s32.totalorder %s15, 0
    %p56 = por %p54, %p55
    %p57 = scmp.ne.s32.totalorder %s49, %s51
    %p58 = scmp.eq.s32.totalorder %s20, 1
    %p59 = por %p57, %p58
    %p60 = scmp.ne.s32.totalorder %s51, %s52
    %p61 = scmp.eq.s32.totalorder %s20, 0
    %p62 = por %p60, %p61
    %p63 = scmp.ne.s32.totalorder %s51, %s52
    %p64 = scmp.eq.s32.totalorder %s21, 1
    %p65 = por %p63, %p64
    %p67 = scmp.ne.s32.totalorder %s52, %s66
    %p68 = scmp.eq.s32.totalorder %s21, 0
    %p69 = por %p67, %p68
    %s71 = sadd.s32 %s70, 1
    %p74 = scmp.eq.s32.totalorder %s15, 1
    %p75 = scmp.ne.s32.totalorder %s70, %s72
    %p76 = scmp.eq.s32.totalorder %s15, 0
    %p77 = por %p75, %p76
    %p78 = scmp.ne.s32.totalorder %s70, %s72
    %p79 = scmp.eq.s32.totalorder %s20, 1
    %p80 = por %p78, %p79
    %p81 = scmp.ne.s32.totalorder %s72, %s73
    %p82 = scmp.eq.s32.totalorder %s20, 0
    %p83 = por %p81, %p82
    %p84 = scmp.ne.s32.totalorder %s72, %s73
    %p85 = scmp.eq.s32.totalorder %s21, 1
    %p86 = por %p84, %p85
    %p88 = scmp.ne.s32.totalorder %s73, %s87
    %p89 = scmp.eq.s32.totalorder %s21, 0
    %p90 = por %p88, %p89
    %s92 = sadd.s32 %s91, 1
    %p95 = scmp.eq.s32.totalorder %s15, 1
    %p96 = scmp.ne.s32.totalorder %s91, %s93
    %p97 = scmp.eq.s32.totalorder %s15, 0
    %p98 = por %p96, %p97
    %p99 = scmp.ne.s32.totalorder %s91, %s93
    %p100 = scmp.eq.s32.totalorder %s20, 1
    %p101 = por %p99, %p100
    %p102 = scmp.ne.s32.totalorder %s93, %s94
    %p103 = scmp.eq.s32.totalorder %s20, 0
    %p104 = por %p102, %p103
    %p105 = scmp.ne.s32.totalorder %s93, %s94
    %p106 = scmp.eq.s32.totalorder %s21, 1
    %p107 = por %p105, %p106
    %p109 = scmp.ne.s32.totalorder %s94, %s108
    %p110 = scmp.eq.s32.totalorder %s21, 0
    %p111 = por %p109, %p110
    %s113 = sadd.s32 %s112, 1
    %p116 = scmp.eq.s32.totalorder %s15, 1
    %p117 = scmp.ne.s32.totalorder %s112, %s114
    %p118 = scmp.eq.s32.totalorder %s15, 0
    %p119 = por %p117, %p118
    %p120 = scmp.ne.s32.totalorder %s112, %s114
    %p121 = scmp.eq.s32.totalorder %s20, 1
    %p122 = por %p120, %p121
    %p123 = scmp.ne.s32.totalorder %s114, %s115
    %p124 = scmp.eq.s32.totalorder %s20, 0
    %p125 = por %p123, %p124
    %p126 = scmp.ne.s32.totalorder %s114, %s115
    %p127 = scmp.eq.s32.totalorder %s21, 1
    %p128 = por %p126, %p127
    %p130 = scmp.ne.s32.totalorder %s115, %s129
    %p131 = scmp.eq.s32.totalorder %s21, 0
    %p132 = por %p130, %p131
    %s134 = sadd.s32 %s133, 1
    %p137 = scmp.eq.s32.totalorder %s15, 1
    %p138 = scmp.ne.s32.totalorder %s133, %s135
    %p139 = scmp.eq.s32.totalorder %s15, 0
    %p140 = por %p138, %p139
    %p141 = scmp.ne.s32.totalorder %s133, %s135
    %p142 = scmp.eq.s32.totalorder %s20, 1
    %p143 = por %p141, %p142
    %p144 = scmp.ne.s32.totalorder %s135, %s136
    %p145 = scmp.eq.s32.totalorder %s20, 0
    %p146 = por %p144, %p145
    %p147 = scmp.ne.s32.totalorder %s135, %s136
    %p148 = scmp.eq.s32.totalorder %s21, 1
    %p149 = por %p147, %p148
    %p151 = scmp.ne.s32.totalorder %s136, %s150
    %p152 = scmp.eq.s32.totalorder %s21, 0
    %p153 = por %p151, %p152
    %s155 = sadd.s32 %s154, 1
    %p158 = scmp.eq.s32.totalorder %s15, 1
    %p159 = scmp.ne.s32.totalorder %s154, %s156
    %p160 = scmp.eq.s32.totalorder %s15, 0
    %p161 = por %p159, %p160
    %p162 = scmp.ne.s32.totalorder %s154, %s156
    %p163 = scmp.eq.s32.totalorder %s20, 1
    %p164 = por %p162, %p163
    %p165 = scmp.ne.s32.totalorder %s156, %s157
    %p166 = scmp.eq.s32.totalorder %s20, 0
    %p167 = por %p165, %p166
    %p168 = scmp.ne.s32.totalorder %s156, %s157
    %p169 = scmp.eq.s32.totalorder %s21, 1
    %p170 = por %p168, %p169
    %p172 = scmp.ne.s32.totalorder %s157, %s171
    %p173 = scmp.eq.s32.totalorder %s21, 0
    %p174 = por %p172, %p173
    %s175 = ssub.s32 %s15, %s22
    %p176 = scmp.eq.s32.totalorder %s175, 0
    %s178 = sadd.s32 %s177, 1
    %s179 = scalar_select %p176, %s177, %s178
    %p182 = pneg %p176
    %p183 = scmp.eq.s32.totalorder %s15, 1
    %p184 = por %p182, %p183
    %p185 = scmp.ne.s32.totalorder %s177, %s180
    %p186 = scmp.eq.s32.totalorder %s15, 0
    %p187 = por %p185, %p186
    %p188 = scmp.ne.s32.totalorder %s177, %s180
    %p189 = scmp.eq.s32.totalorder %s20, 1
    %p190 = por %p188, %p189
    %p191 = scmp.ne.s32.totalorder %s180, %s181
    %p192 = scmp.eq.s32.totalorder %s20, 0
    %p193 = por %p191, %p192
    %p194 = scmp.ne.s32.totalorder %s180, %s181
    %p195 = scmp.eq.s32.totalorder %s21, 1
    %p196 = por %p194, %p195
    %p198 = scmp.ne.s32.totalorder %s181, %s197
    %p199 = scmp.eq.s32.totalorder %s21, 0
    %p200 = por %p198, %p199
    %s201 = ssub.s32 %s15, %s22
    %p202 = scmp.eq.s32.totalorder %s201, 0
    %s204 = sadd.s32 %s203, 1
    %s205 = scalar_select %p202, %s203, %s204
    %p208 = pneg %p202
    %p209 = scmp.eq.s32.totalorder %s15, 1
    %p210 = por %p208, %p209
    %p211 = scmp.ne.s32.totalorder %s203, %s206
    %p212 = scmp.eq.s32.totalorder %s15, 0
    %p213 = por %p211, %p212
    %p214 = scmp.ne.s32.totalorder %s203, %s206
    %p215 = scmp.eq.s32.totalorder %s20, 1
    %p216 = por %p214, %p215
    %p217 = scmp.ne.s32.totalorder %s206, %s207
    %p218 = scmp.eq.s32.totalorder %s20, 0
    %p219 = por %p217, %p218
    %p220 = scmp.ne.s32.totalorder %s206, %s207
    %p221 = scmp.eq.s32.totalorder %s21, 1
    %p222 = por %p220, %p221
    %p224 = scmp.ne.s32.totalorder %s207, %s223
    %p225 = scmp.eq.s32.totalorder %s21, 0
    %p226 = por %p224, %p225
    %p227 = scmp.le.s32.totalorder 1, %s15
    %p228 = scmp.lt.s32.totalorder %s15, 3
    %p229 = pnand %p227, %p228
    %p230 = pneg %p229
    // Predicated region
    $region9: #{bottleneckx_forward.2} parent=5 // pred_check
      _
    $region10: #{bottleneckx_forward.2} parent=5 // pred_check_branch
      %232 = sbr.rel (%p229) target = $region12
    $region11: #{bottleneckx_forward.2} parent=5 // pred_region
      %s233 = ssub.s32 %s15, 1
      // Predicated region
      $region13: #{bottleneckx_forward.2} parent=11 // pred_check
        %p234 = pneg %p62
      $region14: #{bottleneckx_forward.2} parent=11 // pred_check_branch
        %236 = sbr.rel (%p234) target = $region16
      $region15: #{bottleneckx_forward.2} parent=11 // pred_region
        _
      $region16: #{bottleneckx_forward.2} parent=11 // pred_fallthru
        _
      // Predicated region
      $region17: #{bottleneckx_forward.2} parent=11 // pred_check
        %p237 = pneg %p83
      $region18: #{bottleneckx_forward.2} parent=11 // pred_check_branch
        %239 = sbr.rel (%p237) target = $region20
      $region19: #{bottleneckx_forward.2} parent=11 // pred_region
        _
      $region20: #{bottleneckx_forward.2} parent=11 // pred_fallthru
        _
      // Predicated region
      $region21: #{bottleneckx_forward.2} parent=11 // pred_check
        %p240 = pneg %p104
      $region22: #{bottleneckx_forward.2} parent=11 // pred_check_branch
        %242 = sbr.rel (%p240) target = $region24
      $region23: #{bottleneckx_forward.2} parent=11 // pred_region
        _
      $region24: #{bottleneckx_forward.2} parent=11 // pred_fallthru
        _
      // Predicated region
      $region25: #{bottleneckx_forward.2} parent=11 // pred_check
        %p243 = pneg %p125
      $region26: #{bottleneckx_forward.2} parent=11 // pred_check_branch
        %245 = sbr.rel (%p243) target = $region28
      $region27: #{bottleneckx_forward.2} parent=11 // pred_region
        _
      $region28: #{bottleneckx_forward.2} parent=11 // pred_fallthru
        _
      // Predicated region
      $region29: #{bottleneckx_forward.2} parent=11 // pred_check
        %p246 = pneg %p146
      $region30: #{bottleneckx_forward.2} parent=11 // pred_check_branch
        %248 = sbr.rel (%p246) target = $region32
      $region31: #{bottleneckx_forward.2} parent=11 // pred_region
        _
      $region32: #{bottleneckx_forward.2} parent=11 // pred_fallthru
        _
      // Predicated region
      $region33: #{bottleneckx_forward.2} parent=11 // pred_check
        %p249 = pneg %p167
      $region34: #{bottleneckx_forward.2} parent=11 // pred_check_branch
        %251 = sbr.rel (%p249) target = $region36
      $region35: #{bottleneckx_forward.2} parent=11 // pred_region
        _
      $region36: #{bottleneckx_forward.2} parent=11 // pred_fallthru
        _
    $region12: #{bottleneckx_forward.2} parent=5 // pred_fallthru
      _
    %p252 = scmp.lt.s32.totalorder %s15, 2
    // Predicated region
    $region37: #{bottleneckx_forward.2} parent=5 // pred_check
      %p253 = pneg %p252
    $region38: #{bottleneckx_forward.2} parent=5 // pred_check_branch
      %255 = sbr.rel (%p253) target = $region40
    $region39: #{bottleneckx_forward.2} parent=5 // pred_region
      // Predicated region
      $region41: #{bottleneckx_forward.2} parent=39 // pred_check
        %p256 = pneg %p35
      $region42: #{bottleneckx_forward.2} parent=39 // pred_check_branch
        %258 = sbr.rel (%p256) target = $region44
      $region43: #{bottleneckx_forward.2} parent=39 // pred_region
        %p259 = scmp.lt.s32.totalorder %s15, 1
        %s260 = scalar_select %p259, %s15, 1
        %s261 = smul.addr %s260, 8
        %s262 = smul.addr %s261, 4
        %s263 = scalar_lea.vmem %s0, %s262
      $region44: #{bottleneckx_forward.2} parent=39 // pred_fallthru
        _
    $region40: #{bottleneckx_forward.2} parent=5 // pred_fallthru
      _
    %p264 = scmp.le.s32.totalorder 1, %s15
    %p265 = scmp.lt.s32.totalorder %s15, 3
    %p266 = pnand %p264, %p265
    %p267 = pneg %p266
    // Predicated region
    $region45: #{bottleneckx_forward.2} parent=5 // pred_check
      _
    $region46: #{bottleneckx_forward.2} parent=5 // pred_check_branch
      %269 = sbr.rel (%p266) target = $region48
    $region47: #{bottleneckx_forward.2} parent=5 // pred_region
      %s270 = ssub.s32 %s15, 1
      %p271 = scmp.lt.s32.totalorder %s20, 1
      %s272 = scalar_select %p271, %s20, 1
      %s273 = smul.addr %s272, 8
      %s274 = smul.addr %s273, 4
      %s275 = scalar_lea.vmem %s0, %s274
      %p276 = pneg %p41
      %p277 = pneg %p38
      %p278 = pneg %p62
      %p279 = pneg %p59
      %p280 = pneg %p83
      %p281 = pneg %p80
      %p282 = pneg %p104
      %p283 = pneg %p101
      %p284 = pneg %p125
      %p285 = pneg %p122
      %p286 = pneg %p146
      %p287 = pneg %p143
      %p288 = pneg %p167
      %p289 = pneg %p164
      %p290 = pneg %p193
      %p291 = pneg %p190
      %p292 = scmp.lt.s32.totalorder %s20, 1
      %s293 = scalar_select %p292, %s20, 1
      %s294 = smul.addr %s293, 8
      %s295 = smul.addr %s294, 4
      %s296 = scalar_lea.vmem %s7, %s295
      %p297 = pneg %p219
      %p298 = pneg %p216
      %p299 = scmp.lt.s32.totalorder %s20, 1
      %s300 = scalar_select %p299, %s20, 1
      %s301 = scalar_lea.vmem %s8, %s300
      %p302 = scmp.lt.s32.totalorder %s20, 1
      %s303 = scalar_select %p302, %s20, 1
      %s304 = smul.addr %s303, 8
      %s305 = smul.addr %s304, 4
      %s306 = scalar_lea.vmem %s0, %s305
      %p307 = scmp.lt.s32.totalorder %s20, 1
      %s308 = scalar_select %p307, %s20, 1
      %s309 = smul.addr %s308, 8
      %s310 = smul.addr %s309, 4
      %s311 = scalar_lea.vmem %s7, %s310
      %p312 = scmp.lt.s32.totalorder %s20, 1
      %s313 = scalar_select %p312, %s20, 1
      %s314 = scalar_lea.vmem %s8, %s313
      %v315 = vld [vmem:[%s306] sm:$0xf]
      %v316 = vld [vmem:[%s306 + $0x4] sm:$0xf]
      %v317 = vld [vmem:[%s306 + $0x8] sm:$0xf]
      %v318 = vld [vmem:[%s306 + $0xc] sm:$0xf]
      %v319 = vld [vmem:[%s306 + $0x10] sm:$0xf]
      %v320 = vld [vmem:[%s306 + $0x14] sm:$0xf]
      %v321 = vld [vmem:[%s306 + $0x18] sm:$0xf]
      %v322 = vld [vmem:[%s306 + $0x1c] sm:$0xf]
      %v323 = vld [vmem:[%s1] sm:$0xf]
      %v324 = vld [vmem:[%s1 + $0x4] sm:$0xf]
      %v325 = vld [vmem:[%s1 + $0x8] sm:$0xf]
      %v326 = vld [vmem:[%s1 + $0xc] sm:$0xf]
      %v327 = vld [vmem:[%s1 + $0x10] sm:$0xf]
      %v328 = vld [vmem:[%s1 + $0x14] sm:$0xf]
      %v329 = vld [vmem:[%s1 + $0x18] sm:$0xf]
      %v330 = vld [vmem:[%s1 + $0x1c] sm:$0xf]
      %v331 = vld [vmem:[%s1 + $0x20] sm:$0xf]
      %v332 = vld [vmem:[%s1 + $0x24] sm:$0xf]
      %v333 = vld [vmem:[%s1 + $0x28] sm:$0xf]
      %v334 = vld [vmem:[%s1 + $0x2c] sm:$0xf]
      %v335 = vld [vmem:[%s1 + $0x30] sm:$0xf]
      %v336 = vld [vmem:[%s1 + $0x34] sm:$0xf]
      %v337 = vld [vmem:[%s1 + $0x38] sm:$0xf]
      %v338 = vld [vmem:[%s1 + $0x3c] sm:$0xf]
      %v339 = vld [vmem:[%s2] sm:$0x1]
      %v341 = vperm.slane %v339, 0
      %v351 = vunpack.c.l.b16 %v315
      %v352 = vunpack.c.l.b16 %v316
      %v353 = vunpack.c.l.b16 %v317
      %v354 = vunpack.c.l.b16 %v318
      %v355 = vunpack.c.l.b16 %v319
      %v356 = vunpack.c.l.b16 %v320
      %v357 = vunpack.c.l.b16 %v321
      %v358 = vunpack.c.l.b16 %v322
      %v359 = vpack.c.b16 %v352, %v351
      %v360 = vpack.c.b16 %v354, %v353
      %v361 = vpack.c.b16 %v356, %v355
      %v362 = vpack.c.b16 %v358, %v357
      %v383 = vunpack.c.l.b16 %v323
      %v384 = vunpack.c.l.b16 %v324
      %v385 = vunpack.c.l.b16 %v325
      %v386 = vunpack.c.l.b16 %v326
      %v387 = vunpack.c.l.b16 %v327
      %v388 = vunpack.c.l.b16 %v328
      %v389 = vunpack.c.l.b16 %v329
      %v390 = vunpack.c.l.b16 %v330
      %v391 = vunpack.c.l.b16 %v331
      %v392 = vunpack.c.l.b16 %v332
      %v393 = vunpack.c.l.b16 %v333
      %v394 = vunpack.c.l.b16 %v334
      %v395 = vunpack.c.l.b16 %v335
      %v396 = vunpack.c.l.b16 %v336
      %v397 = vunpack.c.l.b16 %v337
      %v398 = vunpack.c.l.b16 %v338
      %v399 = vpack.c.b16 %v384, %v383
      %v400 = vpack.c.b16 %v386, %v385
      %v401 = vpack.c.b16 %v388, %v387
      %v402 = vpack.c.b16 %v390, %v389
      %v403 = vpack.c.b16 %v392, %v391
      %v404 = vpack.c.b16 %v394, %v393
      %v405 = vpack.c.b16 %v396, %v395
      %v406 = vpack.c.b16 %v398, %v397
      %415 = vmatpush.bf16.msra.mxu0 %v406
      %416 = vmatpush.bf16.msra.mxu0 %v405
      %417 = vmatpush.bf16.msra.mxu0 %v404
      %418 = vmatpush.bf16.msra.mxu0 %v403
      %419 = vmatpush.bf16.msra.mxu0 %v402
      %420 = vmatpush.bf16.msra.mxu0 %v401
      %421 = vmatpush.bf16.msra.mxu0 %v400
      %422 = vmatpush.bf16.msra.mxu0 %v399
      %423 = vmatmul.bf16.gmra.mxu0 %v359
      %v424 = vpop.f32.mrf.mxu0
      %v425 = vadd.f32 %v341, %v424
      %v426 = vpop.f32.mrf.mxu0
      %v427 = vadd.f32 %v341, %v426
      %428 = vmatmul.bf16.gmra.mxu0 %v360
      %v429 = vpop.f32.mrf.mxu0
      %v430 = vadd.f32 %v341, %v429
      %v431 = vpop.f32.mrf.mxu0
      %v432 = vadd.f32 %v341, %v431
      %433 = vmatmul.bf16.gmra.mxu0 %v361
      %v434 = vpop.f32.mrf.mxu0
      %v435 = vadd.f32 %v341, %v434
      %v436 = vpop.f32.mrf.mxu0
      %v437 = vadd.f32 %v341, %v436
      %438 = vmatmul.bf16.gmra.mxu0 %v362
      %v439 = vpop.f32.mrf.mxu0
      %v440 = vadd.f32 %v341, %v439
      %v441 = vpop.f32.mrf.mxu0
      %v442 = vadd.f32 %v341, %v441
      %443 = vdwg.mxu0
      %v444 = vmax.f32 %v425, 0.0
      %v445 = vmax.f32 %v427, 0.0
      %v446 = vmax.f32 %v430, 0.0
      %v447 = vmax.f32 %v432, 0.0
      %v448 = vmax.f32 %v435, 0.0
      %v449 = vmax.f32 %v437, 0.0
      %v450 = vmax.f32 %v440, 0.0
      %v451 = vmax.f32 %v442, 0.0
      %452 = vst [vmem:[#allocation2] sm:$0xff] 0.0
      %453 = vst [vmem:[#allocation2 + $0x8] sm:$0xff] 0.0
      %454 = vst [vmem:[#allocation2 + $0x50] sm:$0xff] 0.0
      %455 = vst [vmem:[#allocation2 + $0x58] sm:$0xff] 0.0
      %456 = vst [vmem:[#allocation2 + $0x10] sm:$0xff] %v444
      %457 = vst [vmem:[#allocation2 + $0x18] sm:$0xff] %v445
      %458 = vst [vmem:[#allocation2 + $0x20] sm:$0xff] %v446
      %459 = vst [vmem:[#allocation2 + $0x28] sm:$0xff] %v447
      %460 = vst [vmem:[#allocation2 + $0x30] sm:$0xff] %v448
      %461 = vst [vmem:[#allocation2 + $0x38] sm:$0xff] %v449
      %462 = vst [vmem:[#allocation2 + $0x40] sm:$0xff] %v450
      %463 = vst [vmem:[#allocation2 + $0x48] sm:$0xff] %v451
      %v464 = vlaneseq
      %v465 = vshrl.u32 %v464, 7
      %v466 = vadd.s32 %v465, 8
      %v467 = vadd.s32 %v465, 16
      %v468 = vadd.s32 %v465, 24
      %v469 = vadd.s32 %v465, 32
      %v470 = vadd.s32 %v465, 40
      %v471 = vadd.s32 %v465, 48
      %v472 = vadd.s32 %v465, 56
      %vm473 = vcmp.lt.s32.totalorder %v465, 0
      %v474 = vsub.s32 0, %v465
      %v475 = vsel %vm473, %v474, %v465
      %v476 = vshrl.u32 %v475, 3
      %v477 = vand.u32 %v475, 7
      %v478 = vsub.s32 0, %v477
      %v479 = vsel %vm473, %v478, %v477
      %vm480 = vcmp.lt.s32.totalorder %v466, 0
      %v481 = vsub.s32 0, %v466
      %v482 = vsel %vm480, %v481, %v466
      %v483 = vshrl.u32 %v482, 3
      %v484 = vand.u32 %v482, 7
      %v485 = vsub.s32 0, %v484
      %v486 = vsel %vm480, %v485, %v484
      %vm487 = vcmp.lt.s32.totalorder %v467, 0
      %v488 = vsub.s32 0, %v467
      %v489 = vsel %vm487, %v488, %v467
      %v490 = vshrl.u32 %v489, 3
      %v491 = vand.u32 %v489, 7
      %v492 = vsub.s32 0, %v491
      %v493 = vsel %vm487, %v492, %v491
      %vm494 = vcmp.lt.s32.totalorder %v468, 0
      %v495 = vsub.s32 0, %v468
      %v496 = vsel %vm494, %v495, %v468
      %v497 = vshrl.u32 %v496, 3
      %v498 = vand.u32 %v496, 7
      %v499 = vsub.s32 0, %v498
      %v500 = vsel %vm494, %v499, %v498
      %vm501 = vcmp.lt.s32.totalorder %v469, 0
      %v502 = vsub.s32 0, %v469
      %v503 = vsel %vm501, %v502, %v469
      %v504 = vshrl.u32 %v503, 3
      %v505 = vand.u32 %v503, 7
      %v506 = vsub.s32 0, %v505
      %v507 = vsel %vm501, %v506, %v505
      %vm508 = vcmp.lt.s32.totalorder %v470, 0
      %v509 = vsub.s32 0, %v470
      %v510 = vsel %vm508, %v509, %v470
      %v511 = vshrl.u32 %v510, 3
      %v512 = vand.u32 %v510, 7
      %v513 = vsub.s32 0, %v512
      %v514 = vsel %vm508, %v513, %v512
      %vm515 = vcmp.lt.s32.totalorder %v471, 0
      %v516 = vsub.s32 0, %v471
      %v517 = vsel %vm515, %v516, %v471
      %v518 = vshrl.u32 %v517, 3
      %v519 = vand.u32 %v517, 7
      %v520 = vsub.s32 0, %v519
      %v521 = vsel %vm515, %v520, %v519
      %vm522 = vcmp.lt.s32.totalorder %v472, 0
      %v523 = vsub.s32 0, %v472
      %v524 = vsel %vm522, %v523, %v472
      %v525 = vshrl.u32 %v524, 3
      %v526 = vand.u32 %v524, 7
      %v527 = vsub.s32 0, %v526
      %v528 = vsel %vm522, %v527, %v526
      %vm529 = vcmp.ne.s32.totalorder %v479, 0
      %vm530 = vcmp.ne.s32.totalorder %v486, 0
      %vm531 = vcmp.ne.s32.totalorder %v493, 0
      %vm532 = vcmp.ne.s32.totalorder %v500, 0
      %vm533 = vcmp.ne.s32.totalorder %v507, 0
      %vm534 = vcmp.ne.s32.totalorder %v514, 0
      %vm535 = vcmp.ne.s32.totalorder %v521, 0
      %vm536 = vcmp.ne.s32.totalorder %v528, 0
      %vm537 = vcmp.lt.s32.totalorder %v479, 0
      %vm538 = vcmp.lt.s32.totalorder %v486, 0
      %vm539 = vcmp.lt.s32.totalorder %v493, 0
      %vm540 = vcmp.lt.s32.totalorder %v500, 0
      %vm541 = vcmp.lt.s32.totalorder %v507, 0
      %vm542 = vcmp.lt.s32.totalorder %v514, 0
      %vm543 = vcmp.lt.s32.totalorder %v521, 0
      %vm544 = vcmp.lt.s32.totalorder %v528, 0
      %vm545 = vmand %vm537, %vm529
      %vm546 = vmand %vm538, %vm530
      %vm547 = vmand %vm539, %vm531
      %vm548 = vmand %vm540, %vm532
      %vm549 = vmand %vm541, %vm533
      %vm550 = vmand %vm542, %vm534
      %vm551 = vmand %vm543, %vm535
      %vm552 = vmand %vm544, %vm536
      %v553 = vadd.s32 %v479, 8
      %v554 = vadd.s32 %v486, 8
      %v555 = vadd.s32 %v493, 8
      %v556 = vadd.s32 %v500, 8
      %v557 = vadd.s32 %v507, 8
      %v558 = vadd.s32 %v514, 8
      %v559 = vadd.s32 %v521, 8
      %v560 = vadd.s32 %v528, 8
      %v561 = vsel %vm545, %v553, %v479
      %v562 = vsel %vm546, %v554, %v486
      %v563 = vsel %vm547, %v555, %v493
      %v564 = vsel %vm548, %v556, %v500
      %v565 = vsel %vm549, %v557, %v507
      %v566 = vsel %vm550, %v558, %v514
      %v567 = vsel %vm551, %v559, %v521
      %v568 = vsel %vm552, %v560, %v528
      %vm569 = vcmp.ge.s32.totalorder %v561, 1
      %vm570 = vcmp.ge.s32.totalorder %v562, 1
      %vm571 = vcmp.ge.s32.totalorder %v563, 1
      %vm572 = vcmp.ge.s32.totalorder %v564, 1
      %vm573 = vcmp.ge.s32.totalorder %v565, 1
      %vm574 = vcmp.ge.s32.totalorder %v566, 1
      %vm575 = vcmp.ge.s32.totalorder %v567, 1
      %vm576 = vcmp.ge.s32.totalorder %v568, 1
      %vm577 = vcmp.le.s32.totalorder %v561, 6
      %vm578 = vcmp.le.s32.totalorder %v562, 6
      %vm579 = vcmp.le.s32.totalorder %v563, 6
      %vm580 = vcmp.le.s32.totalorder %v564, 6
      %vm581 = vcmp.le.s32.totalorder %v565, 6
      %vm582 = vcmp.le.s32.totalorder %v566, 6
      %vm583 = vcmp.le.s32.totalorder %v567, 6
      %vm584 = vcmp.le.s32.totalorder %v568, 6
      %v585 = vld [vmem:[#allocation2 + $0x7] sm:$0xff]
      %v586 = vld [vmem:[#allocation2 + $0xf] sm:$0xff]
      %v587 = vld [vmem:[#allocation2 + $0x17] sm:$0xff]
      %v588 = vld [vmem:[#allocation2 + $0x1f] sm:$0xff]
      %v589 = vld [vmem:[#allocation2 + $0x27] sm:$0xff]
      %v590 = vld [vmem:[#allocation2 + $0x2f] sm:$0xff]
      %v591 = vld [vmem:[#allocation2 + $0x37] sm:$0xff]
      %v592 = vld [vmem:[#allocation2 + $0x3f] sm:$0xff]
      %v593 = vsel %vm569, 1, 0
      %v594 = vsel %vm570, 1, 0
      %v595 = vsel %vm571, 1, 0
      %v596 = vsel %vm572, 1, 0
      %v597 = vsel %vm573, 1, 0
      %v598 = vsel %vm574, 1, 0
      %v599 = vsel %vm575, 1, 0
      %v600 = vsel %vm576, 1, 0
      %vm601 = vcmp.eq.s32.totalorder %v593, 1
      %vm602 = vcmp.eq.s32.totalorder %v594, 1
      %vm603 = vcmp.eq.s32.totalorder %v595, 1
      %vm604 = vcmp.eq.s32.totalorder %v596, 1
      %vm605 = vcmp.eq.s32.totalorder %v597, 1
      %vm606 = vcmp.eq.s32.totalorder %v598, 1
      %vm607 = vcmp.eq.s32.totalorder %v599, 1
      %vm608 = vcmp.eq.s32.totalorder %v600, 1
      %v609 = vsel %vm601, %v585, 0.0
      %v610 = vsel %vm602, %v586, 0.0
      %v611 = vsel %vm603, %v587, 0.0
      %v612 = vsel %vm604, %v588, 0.0
      %v613 = vsel %vm605, %v589, 0.0
      %v614 = vsel %vm606, %v590, 0.0
      %v615 = vsel %vm607, %v591, 0.0
      %v616 = vsel %vm608, %v592, 0.0
      %v617 = vpack.c.bf16 %v610, %v609
      %v618 = vpack.c.bf16 %v612, %v611
      %v619 = vpack.c.bf16 %v614, %v613
      %v620 = vpack.c.bf16 %v616, %v615
      %v621 = vld [vmem:[%s3] sm:$0xf]
      %v622 = vld [vmem:[%s3 + $0x4] sm:$0xf]
      %v623 = vld [vmem:[%s3 + $0x8] sm:$0xf]
      %v624 = vld [vmem:[%s3 + $0xc] sm:$0xf]
      %v625 = vld [vmem:[%s3 + $0x10] sm:$0xf]
      %v626 = vld [vmem:[%s3 + $0x14] sm:$0xf]
      %v627 = vld [vmem:[%s3 + $0x18] sm:$0xf]
      %v628 = vld [vmem:[%s3 + $0x1c] sm:$0xf]
      %v629 = vld [vmem:[%s3 + $0x20] sm:$0xf]
      %v630 = vld [vmem:[%s3 + $0x24] sm:$0xf]
      %v631 = vld [vmem:[%s3 + $0x28] sm:$0xf]
      %v632 = vld [vmem:[%s3 + $0x2c] sm:$0xf]
      %v633 = vld [vmem:[%s3 + $0x30] sm:$0xf]
      %v634 = vld [vmem:[%s3 + $0x34] sm:$0xf]
      %v635 = vld [vmem:[%s3 + $0x38] sm:$0xf]
      %v636 = vld [vmem:[%s3 + $0x3c] sm:$0xf]
      %v637 = vld [vmem:[#allocation2 + $0x8] sm:$0xff]
      %v638 = vld [vmem:[#allocation2 + $0x10] sm:$0xff]
      %v639 = vld [vmem:[#allocation2 + $0x18] sm:$0xff]
      %v640 = vld [vmem:[#allocation2 + $0x20] sm:$0xff]
      %v641 = vld [vmem:[#allocation2 + $0x28] sm:$0xff]
      %v642 = vld [vmem:[#allocation2 + $0x30] sm:$0xff]
      %v643 = vld [vmem:[#allocation2 + $0x38] sm:$0xff]
      %v644 = vld [vmem:[#allocation2 + $0x40] sm:$0xff]
      %v645 = vpack.c.bf16 %v638, %v637
      %v646 = vpack.c.bf16 %v640, %v639
      %v647 = vpack.c.bf16 %v642, %v641
      %v648 = vpack.c.bf16 %v644, %v643
      %s649 = scalar_lea.vmem %s3, 64
      %v650 = vld [vmem:[%s649] sm:$0xf]
      %v651 = vld [vmem:[%s649 + $0x4] sm:$0xf]
      %v652 = vld [vmem:[%s649 + $0x8] sm:$0xf]
      %v653 = vld [vmem:[%s649 + $0xc] sm:$0xf]
      %v654 = vld [vmem:[%s649 + $0x10] sm:$0xf]
      %v655 = vld [vmem:[%s649 + $0x14] sm:$0xf]
      %v656 = vld [vmem:[%s649 + $0x18] sm:$0xf]
      %v657 = vld [vmem:[%s649 + $0x1c] sm:$0xf]
      %v658 = vld [vmem:[%s649 + $0x20] sm:$0xf]
      %v659 = vld [vmem:[%s649 + $0x24] sm:$0xf]
      %v660 = vld [vmem:[%s649 + $0x28] sm:$0xf]
      %v661 = vld [vmem:[%s649 + $0x2c] sm:$0xf]
      %v662 = vld [vmem:[%s649 + $0x30] sm:$0xf]
      %v663 = vld [vmem:[%s649 + $0x34] sm:$0xf]
      %v664 = vld [vmem:[%s649 + $0x38] sm:$0xf]
      %v665 = vld [vmem:[%s649 + $0x3c] sm:$0xf]
      %v682 = vunpack.c.l.b16 %v650
      %v683 = vunpack.c.l.b16 %v651
      %v684 = vunpack.c.l.b16 %v652
      %v685 = vunpack.c.l.b16 %v653
      %v686 = vunpack.c.l.b16 %v654
      %v687 = vunpack.c.l.b16 %v655
      %v688 = vunpack.c.l.b16 %v656
      %v689 = vunpack.c.l.b16 %v657
      %v690 = vunpack.c.l.b16 %v658
      %v691 = vunpack.c.l.b16 %v659
      %v692 = vunpack.c.l.b16 %v660
      %v693 = vunpack.c.l.b16 %v661
      %v694 = vunpack.c.l.b16 %v662
      %v695 = vunpack.c.l.b16 %v663
      %v696 = vunpack.c.l.b16 %v664
      %v697 = vunpack.c.l.b16 %v665
      %v698 = vpack.c.b16 %v683, %v682
      %v699 = vpack.c.b16 %v685, %v684
      %v700 = vpack.c.b16 %v687, %v686
      %v701 = vpack.c.b16 %v689, %v688
      %v702 = vpack.c.b16 %v691, %v690
      %v703 = vpack.c.b16 %v693, %v692
      %v704 = vpack.c.b16 %v695, %v694
      %v705 = vpack.c.b16 %v697, %v696
      %714 = vmatpush.bf16.msra.mxu0 %v705
      %715 = vmatpush.bf16.msra.mxu0 %v704
      %716 = vmatpush.bf16.msra.mxu0 %v703
      %717 = vmatpush.bf16.msra.mxu0 %v702
      %718 = vmatpush.bf16.msra.mxu0 %v701
      %719 = vmatpush.bf16.msra.mxu0 %v700
      %720 = vmatpush.bf16.msra.mxu0 %v699
      %721 = vmatpush.bf16.msra.mxu0 %v698
      %722 = vmatmul.bf16.gmra.mxu0 %v645
      %v723 = vpop.f32.mrf.mxu0
      %v724 = vadd.f32 0.0, %v723
      %v725 = vpop.f32.mrf.mxu0
      %v726 = vadd.f32 0.0, %v725
      %727 = vmatmul.bf16.gmra.mxu0 %v646
      %v728 = vpop.f32.mrf.mxu0
      %v729 = vadd.f32 0.0, %v728
      %v730 = vpop.f32.mrf.mxu0
      %v731 = vadd.f32 0.0, %v730
      %732 = vmatmul.bf16.gmra.mxu0 %v647
      %v733 = vpop.f32.mrf.mxu0
      %v734 = vadd.f32 0.0, %v733
      %v735 = vpop.f32.mrf.mxu0
      %v736 = vadd.f32 0.0, %v735
      %737 = vmatmul.bf16.gmra.mxu0 %v648
      %v738 = vpop.f32.mrf.mxu0
      %v739 = vadd.f32 0.0, %v738
      %v740 = vpop.f32.mrf.mxu0
      %v741 = vadd.f32 0.0, %v740
      %742 = vdwg.mxu0
      %v759 = vunpack.c.l.b16 %v621
      %v760 = vunpack.c.l.b16 %v622
      %v761 = vunpack.c.l.b16 %v623
      %v762 = vunpack.c.l.b16 %v624
      %v763 = vunpack.c.l.b16 %v625
      %v764 = vunpack.c.l.b16 %v626
      %v765 = vunpack.c.l.b16 %v627
      %v766 = vunpack.c.l.b16 %v628
      %v767 = vunpack.c.l.b16 %v629
      %v768 = vunpack.c.l.b16 %v630
      %v769 = vunpack.c.l.b16 %v631
      %v770 = vunpack.c.l.b16 %v632
      %v771 = vunpack.c.l.b16 %v633
      %v772 = vunpack.c.l.b16 %v634
      %v773 = vunpack.c.l.b16 %v635
      %v774 = vunpack.c.l.b16 %v636
      %v775 = vpack.c.b16 %v760, %v759
      %v776 = vpack.c.b16 %v762, %v761
      %v777 = vpack.c.b16 %v764, %v763
      %v778 = vpack.c.b16 %v766, %v765
      %v779 = vpack.c.b16 %v768, %v767
      %v780 = vpack.c.b16 %v770, %v769
      %v781 = vpack.c.b16 %v772, %v771
      %v782 = vpack.c.b16 %v774, %v773
      %791 = vmatpush.bf16.msra.mxu0 %v782
      %792 = vmatpush.bf16.msra.mxu0 %v781
      %793 = vmatpush.bf16.msra.mxu0 %v780
      %794 = vmatpush.bf16.msra.mxu0 %v779
      %795 = vmatpush.bf16.msra.mxu0 %v778
      %796 = vmatpush.bf16.msra.mxu0 %v777
      %797 = vmatpush.bf16.msra.mxu0 %v776
      %798 = vmatpush.bf16.msra.mxu0 %v775
      %799 = vmatmul.bf16.gmra.mxu0 %v617
      %v800 = vpop.f32.mrf.mxu0
      %v801 = vadd.f32 %v724, %v800
      %v802 = vpop.f32.mrf.mxu0
      %v803 = vadd.f32 %v726, %v802
      %804 = vmatmul.bf16.gmra.mxu0 %v618
      %v805 = vpop.f32.mrf.mxu0
      %v806 = vadd.f32 %v729, %v805
      %v807 = vpop.f32.mrf.mxu0
      %v808 = vadd.f32 %v731, %v807
      %809 = vmatmul.bf16.gmra.mxu0 %v619
      %v810 = vpop.f32.mrf.mxu0
      %v811 = vadd.f32 %v734, %v810
      %v812 = vpop.f32.mrf.mxu0
      %v813 = vadd.f32 %v736, %v812
      %814 = vmatmul.bf16.gmra.mxu0 %v620
      %v815 = vpop.f32.mrf.mxu0
      %v816 = vadd.f32 %v739, %v815
      %v817 = vpop.f32.mrf.mxu0
      %v818 = vadd.f32 %v741, %v817
      %819 = vdwg.mxu0
      %v820 = vld [vmem:[#allocation2 + $0x9] sm:$0xff]
      %v821 = vld [vmem:[#allocation2 + $0x11] sm:$0xff]
      %v822 = vld [vmem:[#allocation2 + $0x19] sm:$0xff]
      %v823 = vld [vmem:[#allocation2 + $0x21] sm:$0xff]
      %v824 = vld [vmem:[#allocation2 + $0x29] sm:$0xff]
      %v825 = vld [vmem:[#allocation2 + $0x31] sm:$0xff]
      %v826 = vld [vmem:[#allocation2 + $0x39] sm:$0xff]
      %v827 = vld [vmem:[#allocation2 + $0x41] sm:$0xff]
      %v828 = vsel %vm577, 1, 0
      %v829 = vsel %vm578, 1, 0
      %v830 = vsel %vm579, 1, 0
      %v831 = vsel %vm580, 1, 0
      %v832 = vsel %vm581, 1, 0
      %v833 = vsel %vm582, 1, 0
      %v834 = vsel %vm583, 1, 0
      %v835 = vsel %vm584, 1, 0
      %vm836 = vcmp.eq.s32.totalorder %v828, 1
      %vm837 = vcmp.eq.s32.totalorder %v829, 1
      %vm838 = vcmp.eq.s32.totalorder %v830, 1
      %vm839 = vcmp.eq.s32.totalorder %v831, 1
      %vm840 = vcmp.eq.s32.totalorder %v832, 1
      %vm841 = vcmp.eq.s32.totalorder %v833, 1
      %vm842 = vcmp.eq.s32.totalorder %v834, 1
      %vm843 = vcmp.eq.s32.totalorder %v835, 1
      %v844 = vsel %vm836, %v820, 0.0
      %v845 = vsel %vm837, %v821, 0.0
      %v846 = vsel %vm838, %v822, 0.0
      %v847 = vsel %vm839, %v823, 0.0
      %v848 = vsel %vm840, %v824, 0.0
      %v849 = vsel %vm841, %v825, 0.0
      %v850 = vsel %vm842, %v826, 0.0
      %v851 = vsel %vm843, %v827, 0.0
      %v852 = vpack.c.bf16 %v845, %v844
      %v853 = vpack.c.bf16 %v847, %v846
      %v854 = vpack.c.bf16 %v849, %v848
      %v855 = vpack.c.bf16 %v851, %v850
      %s856 = scalar_lea.vmem %s3, 128
      %v857 = vld [vmem:[%s856] sm:$0xf]
      %v858 = vld [vmem:[%s856 + $0x4] sm:$0xf]
      %v859 = vld [vmem:[%s856 + $0x8] sm:$0xf]
      %v860 = vld [vmem:[%s856 + $0xc] sm:$0xf]
      %v861 = vld [vmem:[%s856 + $0x10] sm:$0xf]
      %v862 = vld [vmem:[%s856 + $0x14] sm:$0xf]
      %v863 = vld [vmem:[%s856 + $0x18] sm:$0xf]
      %v864 = vld [vmem:[%s856 + $0x1c] sm:$0xf]
      %v865 = vld [vmem:[%s856 + $0x20] sm:$0xf]
      %v866 = vld [vmem:[%s856 + $0x24] sm:$0xf]
      %v867 = vld [vmem:[%s856 + $0x28] sm:$0xf]
      %v868 = vld [vmem:[%s856 + $0x2c] sm:$0xf]
      %v869 = vld [vmem:[%s856 + $0x30] sm:$0xf]
      %v870 = vld [vmem:[%s856 + $0x34] sm:$0xf]
      %v871 = vld [vmem:[%s856 + $0x38] sm:$0xf]
      %v872 = vld [vmem:[%s856 + $0x3c] sm:$0xf]
      %v889 = vunpack.c.l.b16 %v857
      %v890 = vunpack.c.l.b16 %v858
      %v891 = vunpack.c.l.b16 %v859
      %v892 = vunpack.c.l.b16 %v860
      %v893 = vunpack.c.l.b16 %v861
      %v894 = vunpack.c.l.b16 %v862
      %v895 = vunpack.c.l.b16 %v863
      %v896 = vunpack.c.l.b16 %v864
      %v897 = vunpack.c.l.b16 %v865
      %v898 = vunpack.c.l.b16 %v866
      %v899 = vunpack.c.l.b16 %v867
      %v900 = vunpack.c.l.b16 %v868
      %v901 = vunpack.c.l.b16 %v869
      %v902 = vunpack.c.l.b16 %v870
      %v903 = vunpack.c.l.b16 %v871
      %v904 = vunpack.c.l.b16 %v872
      %v905 = vpack.c.b16 %v890, %v889
      %v906 = vpack.c.b16 %v892, %v891
      %v907 = vpack.c.b16 %v894, %v893
      %v908 = vpack.c.b16 %v896, %v895
      %v909 = vpack.c.b16 %v898, %v897
      %v910 = vpack.c.b16 %v900, %v899
      %v911 = vpack.c.b16 %v902, %v901
      %v912 = vpack.c.b16 %v904, %v903
      %921 = vmatpush.bf16.msra.mxu0 %v912
      %922 = vmatpush.bf16.msra.mxu0 %v911
      %923 = vmatpush.bf16.msra.mxu0 %v910
      %924 = vmatpush.bf16.msra.mxu0 %v909
      %925 = vmatpush.bf16.msra.mxu0 %v908
      %926 = vmatpush.bf16.msra.mxu0 %v907
      %927 = vmatpush.bf16.msra.mxu0 %v906
      %928 = vmatpush.bf16.msra.mxu0 %v905
      %929 = vmatmul.bf16.gmra.mxu0 %v852
      %v930 = vpop.f32.mrf.mxu0
      %v931 = vadd.f32 0.0, %v930
      %v932 = vpop.f32.mrf.mxu0
      %v933 = vadd.f32 0.0, %v932
      %934 = vmatmul.bf16.gmra.mxu0 %v853
      %v935 = vpop.f32.mrf.mxu0
      %v936 = vadd.f32 0.0, %v935
      %v937 = vpop.f32.mrf.mxu0
      %v938 = vadd.f32 0.0, %v937
      %939 = vmatmul.bf16.gmra.mxu0 %v854
      %v940 = vpop.f32.mrf.mxu0
      %v941 = vadd.f32 0.0, %v940
      %v942 = vpop.f32.mrf.mxu0
      %v943 = vadd.f32 0.0, %v942
      %944 = vmatmul.bf16.gmra.mxu0 %v855
      %v945 = vpop.f32.mrf.mxu0
      %v946 = vadd.f32 0.0, %v945
      %v947 = vpop.f32.mrf.mxu0
      %v948 = vadd.f32 0.0, %v947
      %949 = vdwg.mxu0
      %v950 = vadd.f32 %v801, %v931
      %v951 = vadd.f32 %v803, %v933
      %v952 = vadd.f32 %v806, %v936
      %v953 = vadd.f32 %v808, %v938
      %v954 = vadd.f32 %v811, %v941
      %v955 = vadd.f32 %v813, %v943
      %v956 = vadd.f32 %v816, %v946
      %v957 = vadd.f32 %v818, %v948
      %v958 = vld [vmem:[#allocation2 + $0xf] sm:$0xff]
      %v959 = vld [vmem:[#allocation2 + $0x17] sm:$0xff]
      %v960 = vld [vmem:[#allocation2 + $0x1f] sm:$0xff]
      %v961 = vld [vmem:[#allocation2 + $0x27] sm:$0xff]
      %v962 = vld [vmem:[#allocation2 + $0x2f] sm:$0xff]
      %v963 = vld [vmem:[#allocation2 + $0x37] sm:$0xff]
      %v964 = vld [vmem:[#allocation2 + $0x3f] sm:$0xff]
      %v965 = vld [vmem:[#allocation2 + $0x47] sm:$0xff]
      %v966 = vsel %vm601, %v958, 0.0
      %v967 = vsel %vm602, %v959, 0.0
      %v968 = vsel %vm603, %v960, 0.0
      %v969 = vsel %vm604, %v961, 0.0
      %v970 = vsel %vm605, %v962, 0.0
      %v971 = vsel %vm606, %v963, 0.0
      %v972 = vsel %vm607, %v964, 0.0
      %v973 = vsel %vm608, %v965, 0.0
      %v974 = vpack.c.bf16 %v967, %v966
      %v975 = vpack.c.bf16 %v969, %v968
      %v976 = vpack.c.bf16 %v971, %v970
      %v977 = vpack.c.bf16 %v973, %v972
      %s978 = scalar_lea.vmem %s3, 192
      %v979 = vld [vmem:[%s978] sm:$0xf]
      %v980 = vld [vmem:[%s978 + $0x4] sm:$0xf]
      %v981 = vld [vmem:[%s978 + $0x8] sm:$0xf]
      %v982 = vld [vmem:[%s978 + $0xc] sm:$0xf]
      %v983 = vld [vmem:[%s978 + $0x10] sm:$0xf]
      %v984 = vld [vmem:[%s978 + $0x14] sm:$0xf]
      %v985 = vld [vmem:[%s978 + $0x18] sm:$0xf]
      %v986 = vld [vmem:[%s978 + $0x1c] sm:$0xf]
      %v987 = vld [vmem:[%s978 + $0x20] sm:$0xf]
      %v988 = vld [vmem:[%s978 + $0x24] sm:$0xf]
      %v989 = vld [vmem:[%s978 + $0x28] sm:$0xf]
      %v990 = vld [vmem:[%s978 + $0x2c] sm:$0xf]
      %v991 = vld [vmem:[%s978 + $0x30] sm:$0xf]
      %v992 = vld [vmem:[%s978 + $0x34] sm:$0xf]
      %v993 = vld [vmem:[%s978 + $0x38] sm:$0xf]
      %v994 = vld [vmem:[%s978 + $0x3c] sm:$0xf]
      %v1011 = vunpack.c.l.b16 %v979
      %v1012 = vunpack.c.l.b16 %v980
      %v1013 = vunpack.c.l.b16 %v981
      %v1014 = vunpack.c.l.b16 %v982
      %v1015 = vunpack.c.l.b16 %v983
      %v1016 = vunpack.c.l.b16 %v984
      %v1017 = vunpack.c.l.b16 %v985
      %v1018 = vunpack.c.l.b16 %v986
      %v1019 = vunpack.c.l.b16 %v987
      %v1020 = vunpack.c.l.b16 %v988
      %v1021 = vunpack.c.l.b16 %v989
      %v1022 = vunpack.c.l.b16 %v990
      %v1023 = vunpack.c.l.b16 %v991
      %v1024 = vunpack.c.l.b16 %v992
      %v1025 = vunpack.c.l.b16 %v993
      %v1026 = vunpack.c.l.b16 %v994
      %v1027 = vpack.c.b16 %v1012, %v1011
      %v1028 = vpack.c.b16 %v1014, %v1013
      %v1029 = vpack.c.b16 %v1016, %v1015
      %v1030 = vpack.c.b16 %v1018, %v1017
      %v1031 = vpack.c.b16 %v1020, %v1019
      %v1032 = vpack.c.b16 %v1022, %v1021
      %v1033 = vpack.c.b16 %v1024, %v1023
      %v1034 = vpack.c.b16 %v1026, %v1025
      %1043 = vmatpush.bf16.msra.mxu0 %v1034
      %1044 = vmatpush.bf16.msra.mxu0 %v1033
      %1045 = vmatpush.bf16.msra.mxu0 %v1032
      %1046 = vmatpush.bf16.msra.mxu0 %v1031
      %1047 = vmatpush.bf16.msra.mxu0 %v1030
      %1048 = vmatpush.bf16.msra.mxu0 %v1029
      %1049 = vmatpush.bf16.msra.mxu0 %v1028
      %1050 = vmatpush.bf16.msra.mxu0 %v1027
      %1051 = vmatmul.bf16.gmra.mxu0 %v974
      %v1052 = vpop.f32.mrf.mxu0
      %v1053 = vadd.f32 0.0, %v1052
      %v1054 = vpop.f32.mrf.mxu0
      %v1055 = vadd.f32 0.0, %v1054
      %1056 = vmatmul.bf16.gmra.mxu0 %v975
      %v1057 = vpop.f32.mrf.mxu0
      %v1058 = vadd.f32 0.0, %v1057
      %v1059 = vpop.f32.mrf.mxu0
      %v1060 = vadd.f32 0.0, %v1059
      %1061 = vmatmul.bf16.gmra.mxu0 %v976
      %v1062 = vpop.f32.mrf.mxu0
      %v1063 = vadd.f32 0.0, %v1062
      %v1064 = vpop.f32.mrf.mxu0
      %v1065 = vadd.f32 0.0, %v1064
      %1066 = vmatmul.bf16.gmra.mxu0 %v977
      %v1067 = vpop.f32.mrf.mxu0
      %v1068 = vadd.f32 0.0, %v1067
      %v1069 = vpop.f32.mrf.mxu0
      %v1070 = vadd.f32 0.0, %v1069
      %1071 = vdwg.mxu0
      %v1072 = vadd.f32 %v950, %v1053
      %v1073 = vadd.f32 %v951, %v1055
      %v1074 = vadd.f32 %v952, %v1058
      %v1075 = vadd.f32 %v953, %v1060
      %v1076 = vadd.f32 %v954, %v1063
      %v1077 = vadd.f32 %v955, %v1065
      %v1078 = vadd.f32 %v956, %v1068
      %v1079 = vadd.f32 %v957, %v1070
      %v1080 = vld [vmem:[#allocation2 + $0x10] sm:$0xff]
      %v1081 = vld [vmem:[#allocation2 + $0x18] sm:$0xff]
      %v1082 = vld [vmem:[#allocation2 + $0x20] sm:$0xff]
      %v1083 = vld [vmem:[#allocation2 + $0x28] sm:$0xff]
      %v1084 = vld [vmem:[#allocation2 + $0x30] sm:$0xff]
      %v1085 = vld [vmem:[#allocation2 + $0x38] sm:$0xff]
      %v1086 = vld [vmem:[#allocation2 + $0x40] sm:$0xff]
      %v1087 = vld [vmem:[#allocation2 + $0x48] sm:$0xff]
      %v1088 = vpack.c.bf16 %v1081, %v1080
      %v1089 = vpack.c.bf16 %v1083, %v1082
      %v1090 = vpack.c.bf16 %v1085, %v1084
      %v1091 = vpack.c.bf16 %v1087, %v1086
      %s1092 = scalar_lea.vmem %s3, 256
      %v1093 = vld [vmem:[%s1092] sm:$0xf]
      %v1094 = vld [vmem:[%s1092 + $0x4] sm:$0xf]
      %v1095 = vld [vmem:[%s1092 + $0x8] sm:$0xf]
      %v1096 = vld [vmem:[%s1092 + $0xc] sm:$0xf]
      %v1097 = vld [vmem:[%s1092 + $0x10] sm:$0xf]
      %v1098 = vld [vmem:[%s1092 + $0x14] sm:$0xf]
      %v1099 = vld [vmem:[%s1092 + $0x18] sm:$0xf]
      %v1100 = vld [vmem:[%s1092 + $0x1c] sm:$0xf]
      %v1101 = vld [vmem:[%s1092 + $0x20] sm:$0xf]
      %v1102 = vld [vmem:[%s1092 + $0x24] sm:$0xf]
      %v1103 = vld [vmem:[%s1092 + $0x28] sm:$0xf]
      %v1104 = vld [vmem:[%s1092 + $0x2c] sm:$0xf]
      %v1105 = vld [vmem:[%s1092 + $0x30] sm:$0xf]
      %v1106 = vld [vmem:[%s1092 + $0x34] sm:$0xf]
      %v1107 = vld [vmem:[%s1092 + $0x38] sm:$0xf]
      %v1108 = vld [vmem:[%s1092 + $0x3c] sm:$0xf]
      %v1125 = vunpack.c.l.b16 %v1093
      %v1126 = vunpack.c.l.b16 %v1094
      %v1127 = vunpack.c.l.b16 %v1095
      %v1128 = vunpack.c.l.b16 %v1096
      %v1129 = vunpack.c.l.b16 %v1097
      %v1130 = vunpack.c.l.b16 %v1098
      %v1131 = vunpack.c.l.b16 %v1099
      %v1132 = vunpack.c.l.b16 %v1100
      %v1133 = vunpack.c.l.b16 %v1101
      %v1134 = vunpack.c.l.b16 %v1102
      %v1135 = vunpack.c.l.b16 %v1103
      %v1136 = vunpack.c.l.b16 %v1104
      %v1137 = vunpack.c.l.b16 %v1105
      %v1138 = vunpack.c.l.b16 %v1106
      %v1139 = vunpack.c.l.b16 %v1107
      %v1140 = vunpack.c.l.b16 %v1108
      %v1141 = vpack.c.b16 %v1126, %v1125
      %v1142 = vpack.c.b16 %v1128, %v1127
      %v1143 = vpack.c.b16 %v1130, %v1129
      %v1144 = vpack.c.b16 %v1132, %v1131
      %v1145 = vpack.c.b16 %v1134, %v1133
      %v1146 = vpack.c.b16 %v1136, %v1135
      %v1147 = vpack.c.b16 %v1138, %v1137
      %v1148 = vpack.c.b16 %v1140, %v1139
      %1157 = vmatpush.bf16.msra.mxu0 %v1148
      %1158 = vmatpush.bf16.msra.mxu0 %v1147
      %1159 = vmatpush.bf16.msra.mxu0 %v1146
      %1160 = vmatpush.bf16.msra.mxu0 %v1145
      %1161 = vmatpush.bf16.msra.mxu0 %v1144
      %1162 = vmatpush.bf16.msra.mxu0 %v1143
      %1163 = vmatpush.bf16.msra.mxu0 %v1142
      %1164 = vmatpush.bf16.msra.mxu0 %v1141
      %1165 = vmatmul.bf16.gmra.mxu0 %v1088
      %v1166 = vpop.f32.mrf.mxu0
      %v1167 = vadd.f32 0.0, %v1166
      %v1168 = vpop.f32.mrf.mxu0
      %v1169 = vadd.f32 0.0, %v1168
      %1170 = vmatmul.bf16.gmra.mxu0 %v1089
      %v1171 = vpop.f32.mrf.mxu0
      %v1172 = vadd.f32 0.0, %v1171
      %v1173 = vpop.f32.mrf.mxu0
      %v1174 = vadd.f32 0.0, %v1173
      %1175 = vmatmul.bf16.gmra.mxu0 %v1090
      %v1176 = vpop.f32.mrf.mxu0
      %v1177 = vadd.f32 0.0, %v1176
      %v1178 = vpop.f32.mrf.mxu0
      %v1179 = vadd.f32 0.0, %v1178
      %1180 = vmatmul.bf16.gmra.mxu0 %v1091
      %v1181 = vpop.f32.mrf.mxu0
      %v1182 = vadd.f32 0.0, %v1181
      %v1183 = vpop.f32.mrf.mxu0
      %v1184 = vadd.f32 0.0, %v1183
      %1185 = vdwg.mxu0
      %v1186 = vadd.f32 %v1072, %v1167
      %v1187 = vadd.f32 %v1073, %v1169
      %v1188 = vadd.f32 %v1074, %v1172
      %v1189 = vadd.f32 %v1075, %v1174
      %v1190 = vadd.f32 %v1076, %v1177
      %v1191 = vadd.f32 %v1077, %v1179
      %v1192 = vadd.f32 %v1078, %v1182
      %v1193 = vadd.f32 %v1079, %v1184
      %v1194 = vld [vmem:[#allocation2 + $0x11] sm:$0xff]
      %v1195 = vld [vmem:[#allocation2 + $0x19] sm:$0xff]
      %v1196 = vld [vmem:[#allocation2 + $0x21] sm:$0xff]
      %v1197 = vld [vmem:[#allocation2 + $0x29] sm:$0xff]
      %v1198 = vld [vmem:[#allocation2 + $0x31] sm:$0xff]
      %v1199 = vld [vmem:[#allocation2 + $0x39] sm:$0xff]
      %v1200 = vld [vmem:[#allocation2 + $0x41] sm:$0xff]
      %v1201 = vld [vmem:[#allocation2 + $0x49] sm:$0xff]
      %v1202 = vsel %vm836, %v1194, 0.0
      %v1203 = vsel %vm837, %v1195, 0.0
      %v1204 = vsel %vm838, %v1196, 0.0
      %v1205 = vsel %vm839, %v1197, 0.0
      %v1206 = vsel %vm840, %v1198, 0.0
      %v1207 = vsel %vm841, %v1199, 0.0
      %v1208 = vsel %vm842, %v1200, 0.0
      %v1209 = vsel %vm843, %v1201, 0.0
      %v1210 = vpack.c.bf16 %v1203, %v1202
      %v1211 = vpack.c.bf16 %v1205, %v1204
      %v1212 = vpack.c.bf16 %v1207, %v1206
      %v1213 = vpack.c.bf16 %v1209, %v1208
      %s1214 = scalar_lea.vmem %s3, 320
      %v1215 = vld [vmem:[%s1214] sm:$0xf]
      %v1216 = vld [vmem:[%s1214 + $0x4] sm:$0xf]
      %v1217 = vld [vmem:[%s1214 + $0x8] sm:$0xf]
      %v1218 = vld [vmem:[%s1214 + $0xc] sm:$0xf]
      %v1219 = vld [vmem:[%s1214 + $0x10] sm:$0xf]
      %v1220 = vld [vmem:[%s1214 + $0x14] sm:$0xf]
      %v1221 = vld [vmem:[%s1214 + $0x18] sm:$0xf]
      %v1222 = vld [vmem:[%s1214 + $0x1c] sm:$0xf]
      %v1223 = vld [vmem:[%s1214 + $0x20] sm:$0xf]
      %v1224 = vld [vmem:[%s1214 + $0x24] sm:$0xf]
      %v1225 = vld [vmem:[%s1214 + $0x28] sm:$0xf]
      %v1226 = vld [vmem:[%s1214 + $0x2c] sm:$0xf]
      %v1227 = vld [vmem:[%s1214 + $0x30] sm:$0xf]
      %v1228 = vld [vmem:[%s1214 + $0x34] sm:$0xf]
      %v1229 = vld [vmem:[%s1214 + $0x38] sm:$0xf]
      %v1230 = vld [vmem:[%s1214 + $0x3c] sm:$0xf]
      %v1247 = vunpack.c.l.b16 %v1215
      %v1248 = vunpack.c.l.b16 %v1216
      %v1249 = vunpack.c.l.b16 %v1217
      %v1250 = vunpack.c.l.b16 %v1218
      %v1251 = vunpack.c.l.b16 %v1219
      %v1252 = vunpack.c.l.b16 %v1220
      %v1253 = vunpack.c.l.b16 %v1221
      %v1254 = vunpack.c.l.b16 %v1222
      %v1255 = vunpack.c.l.b16 %v1223
      %v1256 = vunpack.c.l.b16 %v1224
      %v1257 = vunpack.c.l.b16 %v1225
      %v1258 = vunpack.c.l.b16 %v1226
      %v1259 = vunpack.c.l.b16 %v1227
      %v1260 = vunpack.c.l.b16 %v1228
      %v1261 = vunpack.c.l.b16 %v1229
      %v1262 = vunpack.c.l.b16 %v1230
      %v1263 = vpack.c.b16 %v1248, %v1247
      %v1264 = vpack.c.b16 %v1250, %v1249
      %v1265 = vpack.c.b16 %v1252, %v1251
      %v1266 = vpack.c.b16 %v1254, %v1253
      %v1267 = vpack.c.b16 %v1256, %v1255
      %v1268 = vpack.c.b16 %v1258, %v1257
      %v1269 = vpack.c.b16 %v1260, %v1259
      %v1270 = vpack.c.b16 %v1262, %v1261
      %1279 = vmatpush.bf16.msra.mxu0 %v1270
      %1280 = vmatpush.bf16.msra.mxu0 %v1269
      %1281 = vmatpush.bf16.msra.mxu0 %v1268
      %1282 = vmatpush.bf16.msra.mxu0 %v1267
      %1283 = vmatpush.bf16.msra.mxu0 %v1266
      %1284 = vmatpush.bf16.msra.mxu0 %v1265
      %1285 = vmatpush.bf16.msra.mxu0 %v1264
      %1286 = vmatpush.bf16.msra.mxu0 %v1263
      %1287 = vmatmul.bf16.gmra.mxu0 %v1210
      %v1288 = vpop.f32.mrf.mxu0
      %v1289 = vadd.f32 0.0, %v1288
      %v1290 = vpop.f32.mrf.mxu0
      %v1291 = vadd.f32 0.0, %v1290
      %1292 = vmatmul.bf16.gmra.mxu0 %v1211
      %v1293 = vpop.f32.mrf.mxu0
      %v1294 = vadd.f32 0.0, %v1293
      %v1295 = vpop.f32.mrf.mxu0
      %v1296 = vadd.f32 0.0, %v1295
      %1297 = vmatmul.bf16.gmra.mxu0 %v1212
      %v1298 = vpop.f32.mrf.mxu0
      %v1299 = vadd.f32 0.0, %v1298
      %v1300 = vpop.f32.mrf.mxu0
      %v1301 = vadd.f32 0.0, %v1300
      %1302 = vmatmul.bf16.gmra.mxu0 %v1213
      %v1303 = vpop.f32.mrf.mxu0
      %v1304 = vadd.f32 0.0, %v1303
      %v1305 = vpop.f32.mrf.mxu0
      %v1306 = vadd.f32 0.0, %v1305
      %1307 = vdwg.mxu0
      %v1308 = vadd.f32 %v1186, %v1289
      %v1309 = vadd.f32 %v1187, %v1291
      %v1310 = vadd.f32 %v1188, %v1294
      %v1311 = vadd.f32 %v1189, %v1296
      %v1312 = vadd.f32 %v1190, %v1299
      %v1313 = vadd.f32 %v1191, %v1301
      %v1314 = vadd.f32 %v1192, %v1304
      %v1315 = vadd.f32 %v1193, %v1306
      %v1316 = vld [vmem:[#allocation2 + $0x17] sm:$0xff]
      %v1317 = vld [vmem:[#allocation2 + $0x1f] sm:$0xff]
      %v1318 = vld [vmem:[#allocation2 + $0x27] sm:$0xff]
      %v1319 = vld [vmem:[#allocation2 + $0x2f] sm:$0xff]
      %v1320 = vld [vmem:[#allocation2 + $0x37] sm:$0xff]
      %v1321 = vld [vmem:[#allocation2 + $0x3f] sm:$0xff]
      %v1322 = vld [vmem:[#allocation2 + $0x47] sm:$0xff]
      %v1323 = vld [vmem:[#allocation2 + $0x4f] sm:$0xff]
      %v1324 = vsel %vm601, %v1316, 0.0
      %v1325 = vsel %vm602, %v1317, 0.0
      %v1326 = vsel %vm603, %v1318, 0.0
      %v1327 = vsel %vm604, %v1319, 0.0
      %v1328 = vsel %vm605, %v1320, 0.0
      %v1329 = vsel %vm606, %v1321, 0.0
      %v1330 = vsel %vm607, %v1322, 0.0
      %v1331 = vsel %vm608, %v1323, 0.0
      %v1332 = vpack.c.bf16 %v1325, %v1324
      %v1333 = vpack.c.bf16 %v1327, %v1326
      %v1334 = vpack.c.bf16 %v1329, %v1328
      %v1335 = vpack.c.bf16 %v1331, %v1330
      %s1336 = scalar_lea.vmem %s3, 384
      %v1337 = vld [vmem:[%s1336] sm:$0xf]
      %v1338 = vld [vmem:[%s1336 + $0x4] sm:$0xf]
      %v1339 = vld [vmem:[%s1336 + $0x8] sm:$0xf]
      %v1340 = vld [vmem:[%s1336 + $0xc] sm:$0xf]
      %v1341 = vld [vmem:[%s1336 + $0x10] sm:$0xf]
      %v1342 = vld [vmem:[%s1336 + $0x14] sm:$0xf]
      %v1343 = vld [vmem:[%s1336 + $0x18] sm:$0xf]
      %v1344 = vld [vmem:[%s1336 + $0x1c] sm:$0xf]
      %v1345 = vld [vmem:[%s1336 + $0x20] sm:$0xf]
      %v1346 = vld [vmem:[%s1336 + $0x24] sm:$0xf]
      %v1347 = vld [vmem:[%s1336 + $0x28] sm:$0xf]
      %v1348 = vld [vmem:[%s1336 + $0x2c] sm:$0xf]
      %v1349 = vld [vmem:[%s1336 + $0x30] sm:$0xf]
      %v1350 = vld [vmem:[%s1336 + $0x34] sm:$0xf]
      %v1351 = vld [vmem:[%s1336 + $0x38] sm:$0xf]
      %v1352 = vld [vmem:[%s1336 + $0x3c] sm:$0xf]
      %v1369 = vunpack.c.l.b16 %v1337
      %v1370 = vunpack.c.l.b16 %v1338
      %v1371 = vunpack.c.l.b16 %v1339
      %v1372 = vunpack.c.l.b16 %v1340
      %v1373 = vunpack.c.l.b16 %v1341
      %v1374 = vunpack.c.l.b16 %v1342
      %v1375 = vunpack.c.l.b16 %v1343
      %v1376 = vunpack.c.l.b16 %v1344
      %v1377 = vunpack.c.l.b16 %v1345
      %v1378 = vunpack.c.l.b16 %v1346
      %v1379 = vunpack.c.l.b16 %v1347
      %v1380 = vunpack.c.l.b16 %v1348
      %v1381 = vunpack.c.l.b16 %v1349
      %v1382 = vunpack.c.l.b16 %v1350
      %v1383 = vunpack.c.l.b16 %v1351
      %v1384 = vunpack.c.l.b16 %v1352
      %v1385 = vpack.c.b16 %v1370, %v1369
      %v1386 = vpack.c.b16 %v1372, %v1371
      %v1387 = vpack.c.b16 %v1374, %v1373
      %v1388 = vpack.c.b16 %v1376, %v1375
      %v1389 = vpack.c.b16 %v1378, %v1377
      %v1390 = vpack.c.b16 %v1380, %v1379
      %v1391 = vpack.c.b16 %v1382, %v1381
      %v1392 = vpack.c.b16 %v1384, %v1383
      %1401 = vmatpush.bf16.msra.mxu0 %v1392
      %1402 = vmatpush.bf16.msra.mxu0 %v1391
      %1403 = vmatpush.bf16.msra.mxu0 %v1390
      %1404 = vmatpush.bf16.msra.mxu0 %v1389
      %1405 = vmatpush.bf16.msra.mxu0 %v1388
      %1406 = vmatpush.bf16.msra.mxu0 %v1387
      %1407 = vmatpush.bf16.msra.mxu0 %v1386
      %1408 = vmatpush.bf16.msra.mxu0 %v1385
      %1409 = vmatmul.bf16.gmra.mxu0 %v1332
      %v1410 = vpop.f32.mrf.mxu0
      %v1411 = vadd.f32 0.0, %v1410
      %v1412 = vpop.f32.mrf.mxu0
      %v1413 = vadd.f32 0.0, %v1412
      %1414 = vmatmul.bf16.gmra.mxu0 %v1333
      %v1415 = vpop.f32.mrf.mxu0
      %v1416 = vadd.f32 0.0, %v1415
      %v1417 = vpop.f32.mrf.mxu0
      %v1418 = vadd.f32 0.0, %v1417
      %1419 = vmatmul.bf16.gmra.mxu0 %v1334
      %v1420 = vpop.f32.mrf.mxu0
      %v1421 = vadd.f32 0.0, %v1420
      %v1422 = vpop.f32.mrf.mxu0
      %v1423 = vadd.f32 0.0, %v1422
      %1424 = vmatmul.bf16.gmra.mxu0 %v1335
      %v1425 = vpop.f32.mrf.mxu0
      %v1426 = vadd.f32 0.0, %v1425
      %v1427 = vpop.f32.mrf.mxu0
      %v1428 = vadd.f32 0.0, %v1427
      %1429 = vdwg.mxu0
      %v1430 = vadd.f32 %v1308, %v1411
      %v1431 = vadd.f32 %v1309, %v1413
      %v1432 = vadd.f32 %v1310, %v1416
      %v1433 = vadd.f32 %v1311, %v1418
      %v1434 = vadd.f32 %v1312, %v1421
      %v1435 = vadd.f32 %v1313, %v1423
      %v1436 = vadd.f32 %v1314, %v1426
      %v1437 = vadd.f32 %v1315, %v1428
      %v1438 = vld [vmem:[#allocation2 + $0x18] sm:$0xff]
      %v1439 = vld [vmem:[#allocation2 + $0x20] sm:$0xff]
      %v1440 = vld [vmem:[#allocation2 + $0x28] sm:$0xff]
      %v1441 = vld [vmem:[#allocation2 + $0x30] sm:$0xff]
      %v1442 = vld [vmem:[#allocation2 + $0x38] sm:$0xff]
      %v1443 = vld [vmem:[#allocation2 + $0x40] sm:$0xff]
      %v1444 = vld [vmem:[#allocation2 + $0x48] sm:$0xff]
      %v1445 = vld [vmem:[#allocation2 + $0x50] sm:$0xff]
      %v1446 = vpack.c.bf16 %v1439, %v1438
      %v1447 = vpack.c.bf16 %v1441, %v1440
      %v1448 = vpack.c.bf16 %v1443, %v1442
      %v1449 = vpack.c.bf16 %v1445, %v1444
      %s1450 = scalar_lea.vmem %s3, 448
      %v1451 = vld [vmem:[%s1450] sm:$0xf]
      %v1452 = vld [vmem:[%s1450 + $0x4] sm:$0xf]
      %v1453 = vld [vmem:[%s1450 + $0x8] sm:$0xf]
      %v1454 = vld [vmem:[%s1450 + $0xc] sm:$0xf]
      %v1455 = vld [vmem:[%s1450 + $0x10] sm:$0xf]
      %v1456 = vld [vmem:[%s1450 + $0x14] sm:$0xf]
      %v1457 = vld [vmem:[%s1450 + $0x18] sm:$0xf]
      %v1458 = vld [vmem:[%s1450 + $0x1c] sm:$0xf]
      %v1459 = vld [vmem:[%s1450 + $0x20] sm:$0xf]
      %v1460 = vld [vmem:[%s1450 + $0x24] sm:$0xf]
      %v1461 = vld [vmem:[%s1450 + $0x28] sm:$0xf]
      %v1462 = vld [vmem:[%s1450 + $0x2c] sm:$0xf]
      %v1463 = vld [vmem:[%s1450 + $0x30] sm:$0xf]
      %v1464 = vld [vmem:[%s1450 + $0x34] sm:$0xf]
      %v1465 = vld [vmem:[%s1450 + $0x38] sm:$0xf]
      %v1466 = vld [vmem:[%s1450 + $0x3c] sm:$0xf]
      %v1483 = vunpack.c.l.b16 %v1451
      %v1484 = vunpack.c.l.b16 %v1452
      %v1485 = vunpack.c.l.b16 %v1453
      %v1486 = vunpack.c.l.b16 %v1454
      %v1487 = vunpack.c.l.b16 %v1455
      %v1488 = vunpack.c.l.b16 %v1456
      %v1489 = vunpack.c.l.b16 %v1457
      %v1490 = vunpack.c.l.b16 %v1458
      %v1491 = vunpack.c.l.b16 %v1459
      %v1492 = vunpack.c.l.b16 %v1460
      %v1493 = vunpack.c.l.b16 %v1461
      %v1494 = vunpack.c.l.b16 %v1462
      %v1495 = vunpack.c.l.b16 %v1463
      %v1496 = vunpack.c.l.b16 %v1464
      %v1497 = vunpack.c.l.b16 %v1465
      %v1498 = vunpack.c.l.b16 %v1466
      %v1499 = vpack.c.b16 %v1484, %v1483
      %v1500 = vpack.c.b16 %v1486, %v1485
      %v1501 = vpack.c.b16 %v1488, %v1487
      %v1502 = vpack.c.b16 %v1490, %v1489
      %v1503 = vpack.c.b16 %v1492, %v1491
      %v1504 = vpack.c.b16 %v1494, %v1493
      %v1505 = vpack.c.b16 %v1496, %v1495
      %v1506 = vpack.c.b16 %v1498, %v1497
      %1515 = vmatpush.bf16.msra.mxu0 %v1506
      %1516 = vmatpush.bf16.msra.mxu0 %v1505
      %1517 = vmatpush.bf16.msra.mxu0 %v1504
      %1518 = vmatpush.bf16.msra.mxu0 %v1503
      %1519 = vmatpush.bf16.msra.mxu0 %v1502
      %1520 = vmatpush.bf16.msra.mxu0 %v1501
      %1521 = vmatpush.bf16.msra.mxu0 %v1500
      %1522 = vmatpush.bf16.msra.mxu0 %v1499
      %1523 = vmatmul.bf16.gmra.mxu0 %v1446
      %v1524 = vpop.f32.mrf.mxu0
      %v1525 = vadd.f32 0.0, %v1524
      %v1526 = vpop.f32.mrf.mxu0
      %v1527 = vadd.f32 0.0, %v1526
      %1528 = vmatmul.bf16.gmra.mxu0 %v1447
      %v1529 = vpop.f32.mrf.mxu0
      %v1530 = vadd.f32 0.0, %v1529
      %v1531 = vpop.f32.mrf.mxu0
      %v1532 = vadd.f32 0.0, %v1531
      %1533 = vmatmul.bf16.gmra.mxu0 %v1448
      %v1534 = vpop.f32.mrf.mxu0
      %v1535 = vadd.f32 0.0, %v1534
      %v1536 = vpop.f32.mrf.mxu0
      %v1537 = vadd.f32 0.0, %v1536
      %1538 = vmatmul.bf16.gmra.mxu0 %v1449
      %v1539 = vpop.f32.mrf.mxu0
      %v1540 = vadd.f32 0.0, %v1539
      %v1541 = vpop.f32.mrf.mxu0
      %v1542 = vadd.f32 0.0, %v1541
      %1543 = vdwg.mxu0
      %v1544 = vadd.f32 %v1430, %v1525
      %v1545 = vadd.f32 %v1431, %v1527
      %v1546 = vadd.f32 %v1432, %v1530
      %v1547 = vadd.f32 %v1433, %v1532
      %v1548 = vadd.f32 %v1434, %v1535
      %v1549 = vadd.f32 %v1435, %v1537
      %v1550 = vadd.f32 %v1436, %v1540
      %v1551 = vadd.f32 %v1437, %v1542
      %v1552 = vld [vmem:[#allocation2 + $0x19] sm:$0xff]
      %v1553 = vld [vmem:[#allocation2 + $0x21] sm:$0xff]
      %v1554 = vld [vmem:[#allocation2 + $0x29] sm:$0xff]
      %v1555 = vld [vmem:[#allocation2 + $0x31] sm:$0xff]
      %v1556 = vld [vmem:[#allocation2 + $0x39] sm:$0xff]
      %v1557 = vld [vmem:[#allocation2 + $0x41] sm:$0xff]
      %v1558 = vld [vmem:[#allocation2 + $0x49] sm:$0xff]
      %v1559 = vld [vmem:[#allocation2 + $0x51] sm:$0xff]
      %v1560 = vsel %vm836, %v1552, 0.0
      %v1561 = vsel %vm837, %v1553, 0.0
      %v1562 = vsel %vm838, %v1554, 0.0
      %v1563 = vsel %vm839, %v1555, 0.0
      %v1564 = vsel %vm840, %v1556, 0.0
      %v1565 = vsel %vm841, %v1557, 0.0
      %v1566 = vsel %vm842, %v1558, 0.0
      %v1567 = vsel %vm843, %v1559, 0.0
      %v1568 = vpack.c.bf16 %v1561, %v1560
      %v1569 = vpack.c.bf16 %v1563, %v1562
      %v1570 = vpack.c.bf16 %v1565, %v1564
      %v1571 = vpack.c.bf16 %v1567, %v1566
      %s1572 = scalar_lea.vmem %s3, 512
      %v1573 = vld [vmem:[%s1572] sm:$0xf]
      %v1574 = vld [vmem:[%s1572 + $0x4] sm:$0xf]
      %v1575 = vld [vmem:[%s1572 + $0x8] sm:$0xf]
      %v1576 = vld [vmem:[%s1572 + $0xc] sm:$0xf]
      %v1577 = vld [vmem:[%s1572 + $0x10] sm:$0xf]
      %v1578 = vld [vmem:[%s1572 + $0x14] sm:$0xf]
      %v1579 = vld [vmem:[%s1572 + $0x18] sm:$0xf]
      %v1580 = vld [vmem:[%s1572 + $0x1c] sm:$0xf]
      %v1581 = vld [vmem:[%s1572 + $0x20] sm:$0xf]
      %v1582 = vld [vmem:[%s1572 + $0x24] sm:$0xf]
      %v1583 = vld [vmem:[%s1572 + $0x28] sm:$0xf]
      %v1584 = vld [vmem:[%s1572 + $0x2c] sm:$0xf]
      %v1585 = vld [vmem:[%s1572 + $0x30] sm:$0xf]
      %v1586 = vld [vmem:[%s1572 + $0x34] sm:$0xf]
      %v1587 = vld [vmem:[%s1572 + $0x38] sm:$0xf]
      %v1588 = vld [vmem:[%s1572 + $0x3c] sm:$0xf]
      %v1605 = vunpack.c.l.b16 %v1573
      %v1606 = vunpack.c.l.b16 %v1574
      %v1607 = vunpack.c.l.b16 %v1575
      %v1608 = vunpack.c.l.b16 %v1576
      %v1609 = vunpack.c.l.b16 %v1577
      %v1610 = vunpack.c.l.b16 %v1578
      %v1611 = vunpack.c.l.b16 %v1579
      %v1612 = vunpack.c.l.b16 %v1580
      %v1613 = vunpack.c.l.b16 %v1581
      %v1614 = vunpack.c.l.b16 %v1582
      %v1615 = vunpack.c.l.b16 %v1583
      %v1616 = vunpack.c.l.b16 %v1584
      %v1617 = vunpack.c.l.b16 %v1585
      %v1618 = vunpack.c.l.b16 %v1586
      %v1619 = vunpack.c.l.b16 %v1587
      %v1620 = vunpack.c.l.b16 %v1588
      %v1621 = vpack.c.b16 %v1606, %v1605
      %v1622 = vpack.c.b16 %v1608, %v1607
      %v1623 = vpack.c.b16 %v1610, %v1609
      %v1624 = vpack.c.b16 %v1612, %v1611
      %v1625 = vpack.c.b16 %v1614, %v1613
      %v1626 = vpack.c.b16 %v1616, %v1615
      %v1627 = vpack.c.b16 %v1618, %v1617
      %v1628 = vpack.c.b16 %v1620, %v1619
      %1637 = vmatpush.bf16.msra.mxu0 %v1628
      %1638 = vmatpush.bf16.msra.mxu0 %v1627
      %1639 = vmatpush.bf16.msra.mxu0 %v1626
      %1640 = vmatpush.bf16.msra.mxu0 %v1625
      %1641 = vmatpush.bf16.msra.mxu0 %v1624
      %1642 = vmatpush.bf16.msra.mxu0 %v1623
      %1643 = vmatpush.bf16.msra.mxu0 %v1622
      %1644 = vmatpush.bf16.msra.mxu0 %v1621
      %1645 = vmatmul.bf16.gmra.mxu0 %v1568
      %v1646 = vpop.f32.mrf.mxu0
      %v1647 = vadd.f32 0.0, %v1646
      %v1648 = vpop.f32.mrf.mxu0
      %v1649 = vadd.f32 0.0, %v1648
      %1650 = vmatmul.bf16.gmra.mxu0 %v1569
      %v1651 = vpop.f32.mrf.mxu0
      %v1652 = vadd.f32 0.0, %v1651
      %v1653 = vpop.f32.mrf.mxu0
      %v1654 = vadd.f32 0.0, %v1653
      %1655 = vmatmul.bf16.gmra.mxu0 %v1570
      %v1656 = vpop.f32.mrf.mxu0
      %v1657 = vadd.f32 0.0, %v1656
      %v1658 = vpop.f32.mrf.mxu0
      %v1659 = vadd.f32 0.0, %v1658
      %1660 = vmatmul.bf16.gmra.mxu0 %v1571
      %v1661 = vpop.f32.mrf.mxu0
      %v1662 = vadd.f32 0.0, %v1661
      %v1663 = vpop.f32.mrf.mxu0
      %v1664 = vadd.f32 0.0, %v1663
      %1665 = vdwg.mxu0
      %v1666 = vadd.f32 %v1544, %v1647
      %v1667 = vadd.f32 %v1545, %v1649
      %v1668 = vadd.f32 %v1546, %v1652
      %v1669 = vadd.f32 %v1547, %v1654
      %v1670 = vadd.f32 %v1548, %v1657
      %v1671 = vadd.f32 %v1549, %v1659
      %v1672 = vadd.f32 %v1550, %v1662
      %v1673 = vadd.f32 %v1551, %v1664
      %v1674 = vld [vmem:[%s4] sm:$0x1]
      %v1676 = vperm.slane %v1674, 0
      %v1678 = vadd.f32 %v1666, %v1676
      %v1679 = vadd.f32 %v1667, %v1676
      %v1680 = vadd.f32 %v1668, %v1676
      %v1681 = vadd.f32 %v1669, %v1676
      %v1682 = vadd.f32 %v1670, %v1676
      %v1683 = vadd.f32 %v1671, %v1676
      %v1684 = vadd.f32 %v1672, %v1676
      %v1685 = vadd.f32 %v1673, %v1676
      %v1686 = vmax.f32 %v1678, 0.0
      %v1687 = vmax.f32 %v1679, 0.0
      %v1688 = vmax.f32 %v1680, 0.0
      %v1689 = vmax.f32 %v1681, 0.0
      %v1690 = vmax.f32 %v1682, 0.0
      %v1691 = vmax.f32 %v1683, 0.0
      %v1692 = vmax.f32 %v1684, 0.0
      %v1693 = vmax.f32 %v1685, 0.0
      %v1694 = vpack.c.bf16 %v1687, %v1686
      %v1695 = vpack.c.bf16 %v1689, %v1688
      %v1696 = vpack.c.bf16 %v1691, %v1690
      %v1697 = vpack.c.bf16 %v1693, %v1692
      %v1698 = vld [vmem:[%s5] sm:$0xf]
      %v1699 = vld [vmem:[%s5 + $0x4] sm:$0xf]
      %v1700 = vld [vmem:[%s5 + $0x8] sm:$0xf]
      %v1701 = vld [vmem:[%s5 + $0xc] sm:$0xf]
      %v1702 = vld [vmem:[%s5 + $0x10] sm:$0xf]
      %v1703 = vld [vmem:[%s5 + $0x14] sm:$0xf]
      %v1704 = vld [vmem:[%s5 + $0x18] sm:$0xf]
      %v1705 = vld [vmem:[%s5 + $0x1c] sm:$0xf]
      %v1706 = vld [vmem:[%s5 + $0x20] sm:$0xf]
      %v1707 = vld [vmem:[%s5 + $0x24] sm:$0xf]
      %v1708 = vld [vmem:[%s5 + $0x28] sm:$0xf]
      %v1709 = vld [vmem:[%s5 + $0x2c] sm:$0xf]
      %v1710 = vld [vmem:[%s5 + $0x30] sm:$0xf]
      %v1711 = vld [vmem:[%s5 + $0x34] sm:$0xf]
      %v1712 = vld [vmem:[%s5 + $0x38] sm:$0xf]
      %v1713 = vld [vmem:[%s5 + $0x3c] sm:$0xf]
      %v1714 = vld [vmem:[%s6] sm:$0x1]
      %v1716 = vperm.slane %v1714, 0
      %v1734 = vunpack.c.l.b16 %v1698
      %v1735 = vunpack.c.l.b16 %v1699
      %v1736 = vunpack.c.l.b16 %v1700
      %v1737 = vunpack.c.l.b16 %v1701
      %v1738 = vunpack.c.l.b16 %v1702
      %v1739 = vunpack.c.l.b16 %v1703
      %v1740 = vunpack.c.l.b16 %v1704
      %v1741 = vunpack.c.l.b16 %v1705
      %v1742 = vunpack.c.l.b16 %v1706
      %v1743 = vunpack.c.l.b16 %v1707
      %v1744 = vunpack.c.l.b16 %v1708
      %v1745 = vunpack.c.l.b16 %v1709
      %v1746 = vunpack.c.l.b16 %v1710
      %v1747 = vunpack.c.l.b16 %v1711
      %v1748 = vunpack.c.l.b16 %v1712
      %v1749 = vunpack.c.l.b16 %v1713
      %v1750 = vpack.c.b16 %v1735, %v1734
      %v1751 = vpack.c.b16 %v1737, %v1736
      %v1752 = vpack.c.b16 %v1739, %v1738
      %v1753 = vpack.c.b16 %v1741, %v1740
      %v1754 = vpack.c.b16 %v1743, %v1742
      %v1755 = vpack.c.b16 %v1745, %v1744
      %v1756 = vpack.c.b16 %v1747, %v1746
      %v1757 = vpack.c.b16 %v1749, %v1748
      %1766 = vmatpush.bf16.msra.mxu0 %v1757
      %1767 = vmatpush.bf16.msra.mxu0 %v1756
      %1768 = vmatpush.bf16.msra.mxu0 %v1755
      %1769 = vmatpush.bf16.msra.mxu0 %v1754
      %1770 = vmatpush.bf16.msra.mxu0 %v1753
      %1771 = vmatpush.bf16.msra.mxu0 %v1752
      %1772 = vmatpush.bf16.msra.mxu0 %v1751
      %1773 = vmatpush.bf16.msra.mxu0 %v1750
      %1774 = vmatmul.bf16.gmra.mxu0 %v1694
      %v1775 = vpop.f32.mrf.mxu0
      %v1776 = vadd.f32 %v1716, %v1775
      %v1777 = vpop.f32.mrf.mxu0
      %v1778 = vadd.f32 %v1716, %v1777
      %1779 = vmatmul.bf16.gmra.mxu0 %v1695
      %v1780 = vpop.f32.mrf.mxu0
      %v1781 = vadd.f32 %v1716, %v1780
      %v1782 = vpop.f32.mrf.mxu0
      %v1783 = vadd.f32 %v1716, %v1782
      %1784 = vmatmul.bf16.gmra.mxu0 %v1696
      %v1785 = vpop.f32.mrf.mxu0
      %v1786 = vadd.f32 %v1716, %v1785
      %v1787 = vpop.f32.mrf.mxu0
      %v1788 = vadd.f32 %v1716, %v1787
      %1789 = vmatmul.bf16.gmra.mxu0 %v1697
      %v1790 = vpop.f32.mrf.mxu0
      %v1791 = vadd.f32 %v1716, %v1790
      %v1792 = vpop.f32.mrf.mxu0
      %v1793 = vadd.f32 %v1716, %v1792
      %1794 = vdwg.mxu0
      %v1795 = vpack.c.bf16 %v1776, %v1776
      %v1796 = vpack.c.bf16 %v1778, %v1778
      %v1797 = vpack.c.bf16 %v1781, %v1781
      %v1798 = vpack.c.bf16 %v1783, %v1783
      %v1799 = vpack.c.bf16 %v1786, %v1786
      %v1800 = vpack.c.bf16 %v1788, %v1788
      %v1801 = vpack.c.bf16 %v1791, %v1791
      %v1802 = vpack.c.bf16 %v1793, %v1793
      %1803 = vst [vmem:[%s311] sm:$0xf] %v1795
      %1804 = vst [vmem:[%s311 + $0x4] sm:$0xf] %v1796
      %1805 = vst [vmem:[%s311 + $0x8] sm:$0xf] %v1797
      %1806 = vst [vmem:[%s311 + $0xc] sm:$0xf] %v1798
      %1807 = vst [vmem:[%s311 + $0x10] sm:$0xf] %v1799
      %1808 = vst [vmem:[%s311 + $0x14] sm:$0xf] %v1800
      %1809 = vst [vmem:[%s311 + $0x18] sm:$0xf] %v1801
      %1810 = vst [vmem:[%s311 + $0x1c] sm:$0xf] %v1802
      %v1811 = vadd.f32 %v1776, %v1778
      %v1812 = vadd.f32 %v1811, %v1781
      %v1813 = vadd.f32 %v1812, %v1783
      %v1814 = vadd.f32 %v1813, %v1786
      %v1815 = vadd.f32 %v1814, %v1788
      %v1816 = vadd.f32 %v1815, %v1791
      %v1817 = vadd.f32 %v1816, %v1793
      %v1818 = vrot.slane %v1817, 4
      %v1819 = vadd.f32 %v1817, %v1818
      %v1820 = vrot.slane %v1819, 2
      %v1821 = vadd.f32 %v1819, %v1820
      %v1822 = vrot.slane %v1821, 1
      %v1823 = vadd.f32 %v1821, %v1822
      %1824 = vst [vmem:[%s314] sm:$0x1] %v1823
      %p1825 = scmp.lt.s32.totalorder %s20, 1
      %s1826 = scalar_select %p1825, %s20, 1
      %s1827 = smul.addr %s1826, 8
      %s1828 = smul.addr %s1827, 4
      %s1829 = scalar_lea.vmem %s7, %s1828
      %p1830 = scmp.lt.s32.totalorder %s20, 1
      %s1831 = scalar_select %p1830, %s20, 1
      %s1832 = scalar_lea.vmem %s8, %s1831
      // Predicated region
      $region49: #{bottleneckx_forward.2} parent=47 // pred_check
        %p1833 = pneg %p190
      $region50: #{bottleneckx_forward.2} parent=47 // pred_check_branch
        %1835 = sbr.rel (%p1833) target = $region52
      $region51: #{bottleneckx_forward.2} parent=47 // pred_region
        _
      $region52: #{bottleneckx_forward.2} parent=47 // pred_fallthru
        _
      // Predicated region
      $region53: #{bottleneckx_forward.2} parent=47 // pred_check
        %p1836 = pneg %p216
      $region54: #{bottleneckx_forward.2} parent=47 // pred_check_branch
        %1838 = sbr.rel (%p1836) target = $region56
      $region55: #{bottleneckx_forward.2} parent=47 // pred_region
        _
      $region56: #{bottleneckx_forward.2} parent=47 // pred_fallthru
        _
    $region48: #{bottleneckx_forward.2} parent=5 // pred_fallthru
      _
    %p1839 = scmp.le.s32.totalorder 2, %s15
    // Predicated region
    $region57: #{bottleneckx_forward.2} parent=5 // pred_check
      %p1840 = pneg %p1839
    $region58: #{bottleneckx_forward.2} parent=5 // pred_check_branch
      %1842 = sbr.rel (%p1840) target = $region60
    $region59: #{bottleneckx_forward.2} parent=5 // pred_region
      %s1843 = ssub.s32 %s15, 2
      // Predicated region
      $region61: #{bottleneckx_forward.2} parent=59 // pred_check
        %p1844 = pneg %p196
      $region62: #{bottleneckx_forward.2} parent=59 // pred_check_branch
        %1846 = sbr.rel (%p1844) target = $region64
      $region63: #{bottleneckx_forward.2} parent=59 // pred_region
        %p1847 = scmp.lt.s32.totalorder %s21, 1
        %s1848 = scalar_select %p1847, %s21, 1
        %s1849 = smul.addr %s1848, 8
        %s1850 = smul.addr %s1849, 4
        %s1851 = scalar_lea.vmem %s7, %s1850
      $region64: #{bottleneckx_forward.2} parent=59 // pred_fallthru
        _
      // Predicated region
      $region65: #{bottleneckx_forward.2} parent=59 // pred_check
        %p1852 = pneg %p222
      $region66: #{bottleneckx_forward.2} parent=59 // pred_check_branch
        %1854 = sbr.rel (%p1852) target = $region68
      $region67: #{bottleneckx_forward.2} parent=59 // pred_region
        %p1855 = scmp.lt.s32.totalorder %s21, 1
        %s1856 = scalar_select %p1855, %s21, 1
        %s1857 = scalar_lea.vmem %s8, %s1856
      $region68: #{bottleneckx_forward.2} parent=59 // pred_fallthru
        _
    $region60: #{bottleneckx_forward.2} parent=5 // pred_fallthru
      _
  $region6: #{bottleneckx_forward.2} parent=0 // loop_footer
    %s19 = sadd.s32 1, %s15
  $region7: #{bottleneckx_forward.2} parent=0 // loop_footer_branch
    %14 = sbr.rel target = $region3
  $region8: #{bottleneckx_forward.2} parent=0 // loop_exit
    _

</llo_original>
